<compile_context>
chip_gen: v7x
topology: tpu7x:2x2x1
jax: 0.10.0
libtpu: 0.0.40
codegen_flags: <defaults>
</compile_context>

<pallas_src>
import functools
import math

import jax
import jax.numpy as jnp
import numpy as np
from jax import lax
from jax.experimental import pallas as pl
from jax.experimental.pallas import tpu as pltpu

_BN_EPS = 1e-5
_LN_EPS = 1e-5
_LANE = 128
_SQRT_2_OVER_PI = math.sqrt(2.0 / math.pi)


def _ceil8(n: int) -> int:
    return -(-int(n) // 8) * 8


# ---------------------------------------------------------------------------
# In-kernel math helpers
# ---------------------------------------------------------------------------

def _gelu_tanh(x):
    # tanh-approx GELU: tanh is a single EUP op in its own bundle slot, vs the
    # long VALU erf polynomial.  |diff vs exact erf GELU| <~ 3e-3.
    return 0.5 * x * (1.0 + jnp.tanh(_SQRT_2_OVER_PI * (x + 0.044715 * x * x * x)))


def _dot(a, b):
    # bf16 operands + f32 accumulation -> guaranteed single MXU pass.
    return jnp.dot(a.astype(jnp.bfloat16), b.astype(jnp.bfloat16),
                   preferred_element_type=jnp.float32)


def _batchnorm(h, gamma, beta):
    """Training-mode BN over axis 0; stats via ONE ones-row matmul on the MXU.

    Moves the cross-sublane column reduction off the XLU onto the (mostly
    idle) MXU and fuses mean / E[h^2] into a single contraction.  gamma/beta
    are zero on padded lanes, so padded lanes stay exactly 0.
    """
    b = h.shape[0]
    w = h.shape[1]
    hh = jnp.concatenate([h, h * h], axis=-1)                   # (B, 2W)
    sums = jnp.dot(jnp.ones((1, b), jnp.float32), hh,
                   preferred_element_type=jnp.float32)          # (1, 2W)
    inv_b = 1.0 / b
    mean = sums[:, :w] * inv_b
    ex2 = sums[:, w:] * inv_b
    var = jnp.maximum(ex2 - mean * mean, 0.0)
    scale = gamma * lax.rsqrt(var + _BN_EPS)                    # rsqrt -> EUP
    shift = beta - mean * scale
    return h * scale + shift


def _layernorm(h, gamma, beta, true_dim):
    """LayerNorm over the last dim.  Lanes >= true_dim must be exactly zero."""
    inv_d = 1.0 / true_dim
    mu = jnp.sum(h, axis=-1, keepdims=True) * inv_d
    ex2 = jnp.sum(h * h, axis=-1, keepdims=True) * inv_d
    var = jnp.maximum(ex2 - mu * mu, 0.0)
    return (h - mu) * lax.rsqrt(var + _LN_EPS) * gamma + beta


def _entity_mlp_pair(x, w1, e_w2, evec, d_w1, d_w2, dvec, hidden):
    """Encoder MLP (with LN) then decoder MLP (no LN) for one entity.

    All intermediates are kept at the padded 128-lane width; lanes >= `hidden`
    are exactly zero by construction of the packed parameter slab.
    """
    # --- encoder: Linear -> GELU -> BN -> Linear -> LayerNorm ---
    h = _dot(x, w1) + evec[0:1, :]
    h = _gelu_tanh(h)
    h = _batchnorm(h, evec[1:2, :], evec[2:3, :])
    enc = _dot(h[:, :hidden], e_w2) + evec[3:4, :]
    enc = _layernorm(enc, evec[4:5, :], evec[5:6, :], hidden)
    # --- decoder: Linear -> GELU -> BN -> Linear (128-lane padded output) ---
    h2 = _dot(enc[:, :hidden], d_w1) + dvec[0:1, :]
    h2 = _gelu_tanh(h2)
    h2 = _batchnorm(h2, dvec[1:2, :], dvec[2:3, :])
    return _dot(h2[:, :hidden], d_w2) + dvec[3:4, :]


def _encode_decode_kernel(xn_ref, xe_ref, xg_ref, slab_ref, o_ref, *,
                          hidden, slab_offs, out_offs):
    """All six MLPs (3 entities x encoder+decoder) fused in one kernel."""
    x_refs = (xn_ref, xe_ref, xg_ref)
    for i in range(3):                               # unrolled at trace time
        x_ref = x_refs[i]
        w1_r, ew2_r, dw1_r, dw2_r, vec_r = slab_offs[i]
        in_dim = x_ref.shape[1]
        # Static, 8-aligned slab views -> plain VMEM loads, no extra DMAs.
        w1 = slab_ref[w1_r:w1_r + in_dim, :]
        e_w2 = slab_ref[ew2_r:ew2_r + hidden, :]
        d_w1 = slab_ref[dw1_r:dw1_r + hidden, :]
        d_w2 = slab_ref[dw2_r:dw2_r + hidden, :]
        evec = slab_ref[vec_r:vec_r + 8, :]
        dvec = slab_ref[vec_r + 8:vec_r + 16, :]
        out = _entity_mlp_pair(x_ref[...], w1, e_w2, evec, d_w1, d_w2, dvec,
                               hidden)
        o_ref[out_offs[i]:out_offs[i] + x_ref.shape[0], :] = out.astype(o_ref.dtype)


# ---------------------------------------------------------------------------
# Parameter construction / packing (wrapper-side, one-time cost)
# ---------------------------------------------------------------------------

def init_mlp_params(key, input_dim, layers):
    """Deterministic init for MLP([h0, h1], input_dim): Linear, BN, Linear, LN."""
    h0, h1 = layers
    k1, k2 = jax.random.split(key)
    lim1 = math.sqrt(6.0 / (input_dim + h0))
    lim2 = math.sqrt(6.0 / (h0 + h1))
    return {
        'w1': jax.random.uniform(k1, (input_dim, h0), jnp.float32, -lim1, lim1),
        'b1': jnp.zeros((h0,), jnp.float32),
        'bn_g': jnp.ones((h0,), jnp.float32),
        'bn_b': jnp.zeros((h0,), jnp.float32),
        'w2': jax.random.uniform(k2, (h0, h1), jnp.float32, -lim2, lim2),
        'b2': jnp.zeros((h1,), jnp.float32),
        'ln_g': jnp.ones((h1,), jnp.float32),
        'ln_b': jnp.zeros((h1,), jnp.float32),
    }


def _pad_block(m, rows):
    out = jnp.zeros((rows, _LANE), jnp.float32)
    return out.at[:m.shape[0], :m.shape[1]].set(m.astype(jnp.float32))


def pack_encode_decode_params(params):
    """Pack all six MLPs into ONE contiguous (P, 128) f32 slab.

    Every sub-block starts at an 8-aligned row and is zero-padded to 128
    lanes, so the kernel unpacks it with static, alignment-friendly slices.
    """
    enc = [params['node_encoder'], params['edge_encoder'], params['global_encoder']]
    dec = [params['node_decoder'], params['edge_decoder'], params['global_decoder']]
    hidden = enc[0]['w2'].shape[1]
    assert hidden % 8 == 0 and hidden <= _LANE
    for p in dec:
        assert p['w2'].shape[1] <= _LANE

    blocks, slab_offs = [], []
    r = 0
    for pe, pd in zip(enc, dec):
        in_dim = pe['w1'].shape[0]
        in_pad = _ceil8(in_dim)
        w1_r = r;  blocks.append(_pad_block(pe['w1'], in_pad)); r += in_pad
        ew2_r = r; blocks.append(_pad_block(pe['w2'], hidden)); r += hidden
        dw1_r = r; blocks.append(_pad_block(pd['w1'], hidden)); r += hidden
        dw2_r = r; blocks.append(_pad_block(pd['w2'], hidden)); r += hidden
        vec_r = r
        evec = jnp.zeros((8, _LANE), jnp.float32)
        for row, v in enumerate((pe['b1'], pe['bn_g'], pe['bn_b'],
                                 pe['b2'], pe['ln_g'], pe['ln_b'])):
            evec = evec.at[row, :v.shape[0]].set(v.astype(jnp.float32))
        dvec = jnp.zeros((8, _LANE), jnp.float32)
        for row, v in enumerate((pd['b1'], pd['bn_g'], pd['bn_b'], pd['b2'])):
            dvec = dvec.at[row, :v.shape[0]].set(v.astype(jnp.float32))
        blocks.append(evec)
        blocks.append(dvec)
        r += 16
        slab_offs.append((w1_r, ew2_r, dw1_r, dw2_r, vec_r))

    slab = jnp.concatenate(blocks, axis=0)
    out_dims = tuple(p['w2'].shape[1] for p in dec)
    return {'slab': slab, 'slab_offs': tuple(slab_offs), 'hidden': hidden,
            'out_dims': out_dims}


# ---------------------------------------------------------------------------
# Forward
# ---------------------------------------------------------------------------

def build_encode_decode(packed):
    """Return a jitted fn (nodes, edges, globals, slab) -> 3 decoded arrays."""
    hidden = packed['hidden']
    slab_offs = packed['slab_offs']
    out_dims = packed['out_dims']
    vmem = pl.BlockSpec(memory_space=pltpu.MemorySpace.VMEM)

    @jax.jit
    def fwd(xn, xe, xg, slab):
        xs = (xn, xe, xg)
        out_offs, off = [], 0
        for x in xs:
            out_offs.append(off)
            off += _ceil8(x.shape[0])
        total_rows = off

        flops = 0
        for x in xs:
            b = x.shape[0]
            flops += 2 * b * (x.shape[1] * _LANE + 3 * hidden * _LANE)  # layer dots
            flops += 2 * 2 * b * 2 * _LANE                              # BN stat dots
        transcendentals = sum(x.shape[0] for x in xs) * 2 * _LANE       # tanh per GELU
        bytes_accessed = 4 * (sum(int(x.size) for x in xs) + int(slab.size)
                              + total_rows * _LANE)
        cost = pl.CostEstimate(flops=int(flops), transcendentals=int(transcendentals),
                               bytes_accessed=int(bytes_accessed))

        kernel = functools.partial(_encode_decode_kernel, hidden=hidden,
                                   slab_offs=slab_offs, out_offs=tuple(out_offs))
        out = pl.pallas_call(
            kernel,
            out_shape=jax.ShapeDtypeStruct((total_rows, _LANE), jnp.float32),
            in_specs=[vmem, vmem, vmem, vmem],
            out_specs=vmem,
            cost_estimate=cost,
        )(xn, xe, xg, slab)

        # Slices live inside the same jit -> fused with the custom call.
        nodes = out[out_offs[0]:out_offs[0] + xn.shape[0], :out_dims[0]]
        edges = out[out_offs[1]:out_offs[1] + xe.shape[0], :out_dims[1]]
        globs = out[out_offs[2]:out_offs[2] + xg.shape[0], :out_dims[2]]
        return nodes, edges, globs

    return fwd


def encode_decode_forward(graph, packed, fwd_fn):
    """JAX/Pallas equivalent of EncodeDecode.forward (returns a 1-element list)."""
    # TODO(synk): the `data.size()[1] == 0 -> ones((N,1))` fallback is not needed
    # here since all feature dims are > 0 in this instantiation.
    nodes, edges, globs = fwd_fn(graph['nodes'], graph['edges'], graph['globals'],
                                 packed['slab'])
    # replace_graph semantics: keep all other fields, swap nodes/edges/globals.
    out = dict(graph)
    out['nodes'] = nodes
    out['edges'] = edges
    out['globals'] = globs
    return [out]


# ---------------------------------------------------------------------------
# Pure-JAX references (for tolerance validation only)
# ---------------------------------------------------------------------------

def _mlp_ref(x, p, with_ln, *, exact):
    if exact:
        dot = lambda a, b: jnp.dot(a, b, preferred_element_type=jnp.float32)
        gelu = lambda v: jax.nn.gelu(v, approximate=False)     # torch default (erf)
    else:
        dot = _dot                                             # bf16 single-pass
        gelu = _gelu_tanh
    h = dot(x, p['w1']) + p['b1']
    h = gelu(h)
    mean = jnp.mean(h, axis=0)
    var = jnp.mean((h - mean) ** 2, axis=0)                    # biased (train mode)
    h = (h - mean) * lax.rsqrt(var + _BN_EPS) * p['bn_g'] + p['bn_b']
    y = dot(h, p['w2']) + p['b2']
    if with_ln:
        mu = jnp.mean(y, axis=-1, keepdims=True)
        v = jnp.mean((y - mu) ** 2, axis=-1, keepdims=True)
        y = (y - mu) * lax.rsqrt(v + _LN_EPS) * p['ln_g'] + p['ln_b']
    return y


def _encode_decode_ref(graph, raw, *, exact):
    n = _mlp_ref(_mlp_ref(graph['nodes'], raw['node_encoder'], True, exact=exact),
                 raw['node_decoder'], False, exact=exact)
    e = _mlp_ref(_mlp_ref(graph['edges'], raw['edge_encoder'], True, exact=exact),
                 raw['edge_decoder'], False, exact=exact)
    g = _mlp_ref(_mlp_ref(graph['globals'], raw['global_encoder'], True, exact=exact),
                 raw['global_decoder'], False, exact=exact)
    return n, e, g


if __name__ == "__main__":
    key = jax.random.PRNGKey(0)
    (k_nodes, k_edges, k_glob,
     k_ne, k_ee, k_ge, k_nd, k_ed, k_gd) = jax.random.split(key, 9)

    # dims = [node_dim, edge_dim, global_dim]
    node_dim, edge_dim, global_dim = 6, 4, 3
    n_nodes, n_edges, n_graphs = 16, 24, 4
    hidden = 32

    graph = {
        'nodes': jax.random.normal(k_nodes, (n_nodes, node_dim), jnp.float32),
        'edges': jax.random.normal(k_edges, (n_edges, edge_dim), jnp.float32),
        'globals': jax.random.normal(k_glob, (n_graphs, global_dim), jnp.float32),
        'n_node': jnp.full((n_graphs,), n_nodes // n_graphs, jnp.int32),
        'n_edge': jnp.full((n_graphs,), n_edges // n_graphs, jnp.int32),
    }

    raw_params = {
        'node_encoder': init_mlp_params(k_ne, node_dim, [hidden, hidden]),
        'edge_encoder': init_mlp_params(k_ee, edge_dim, [hidden, hidden]),
        'global_encoder': init_mlp_params(k_ge, global_dim, [hidden, hidden]),
        'node_decoder': init_mlp_params(k_nd, hidden, [hidden, 5]),
        'edge_decoder': init_mlp_params(k_ed, hidden, [hidden, 5]),
        'global_decoder': init_mlp_params(k_gd, hidden, [hidden, 2]),
    }
    packed = pack_encode_decode_params(raw_params)
    fwd_fn = build_encode_decode(packed)

    out_graphs = encode_decode_forward(graph, packed, fwd_fn)
    out = out_graphs[0]
    jax.block_until_ready((out['nodes'], out['edges'], out['globals']))

    assert out['nodes'].shape == (n_nodes, 5)
    assert out['edges'].shape == (n_edges, 5)
    assert out['globals'].shape == (n_graphs, 2)

    # Tight check vs a reference using the same documented approximations
    # (tanh GELU, bf16 single-pass matmuls) -> validates packing / BN / LN.
    ref_matched = _encode_decode_ref(graph, raw_params, exact=False)
    for got, want in zip((out['nodes'], out['edges'], out['globals']), ref_matched):
        np.testing.assert_allclose(np.asarray(got), np.asarray(want),
                                   atol=5e-2, rtol=5e-2)
    # Loose sanity check vs the exact-erf fp32 reference (PyTorch semantics).
    ref_exact = _encode_decode_ref(graph, raw_params, exact=True)
    for got, want in zip((out['nodes'], out['edges'], out['globals']), ref_exact):
        np.testing.assert_allclose(np.asarray(got), np.asarray(want),
                                   atol=2.5e-1, rtol=2.5e-1)

    print("KERNEL_OK")
</pallas_src>

<mosaic_0001>
module attributes {stable_mosaic.version = 11 : i64} {
  func.func @_encode_decode_kernel(%arg0: memref<16x6xf32, #tpu.memory_space<vmem>>, %arg1: memref<24x4xf32, #tpu.memory_space<vmem>>, %arg2: memref<4x3xf32, #tpu.memory_space<vmem>>, %arg3: memref<360x128xf32, #tpu.memory_space<vmem>>, %arg4: memref<48x128xf32, #tpu.memory_space<vmem>>) attributes {dimension_semantics = [], scalar_prefetch = 0 : i64, scratch_operands = 0 : i64, tpu.core_type = #tpu.core_type<tc>} {
    %c0 = arith.constant 0 : index
    %c0_0 = arith.constant 0 : index
    %0 = vector.load %arg3[%c0, %c0_0] : memref<360x128xf32, #tpu.memory_space<vmem>>, vector<6x128xf32>
    %c8 = arith.constant 8 : index
    %c0_1 = arith.constant 0 : index
    %1 = vector.load %arg3[%c8, %c0_1] : memref<360x128xf32, #tpu.memory_space<vmem>>, vector<32x128xf32>
    %c40 = arith.constant 40 : index
    %c0_2 = arith.constant 0 : index
    %2 = vector.load %arg3[%c40, %c0_2] : memref<360x128xf32, #tpu.memory_space<vmem>>, vector<32x128xf32>
    %c72 = arith.constant 72 : index
    %c0_3 = arith.constant 0 : index
    %3 = vector.load %arg3[%c72, %c0_3] : memref<360x128xf32, #tpu.memory_space<vmem>>, vector<32x128xf32>
    %c104 = arith.constant 104 : index
    %c0_4 = arith.constant 0 : index
    %4 = vector.load %arg3[%c104, %c0_4] : memref<360x128xf32, #tpu.memory_space<vmem>>, vector<8x128xf32>
    %c112 = arith.constant 112 : index
    %c0_5 = arith.constant 0 : index
    %5 = vector.load %arg3[%c112, %c0_5] : memref<360x128xf32, #tpu.memory_space<vmem>>, vector<8x128xf32>
    %c0_6 = arith.constant 0 : index
    %c0_7 = arith.constant 0 : index
    %6 = vector.load %arg0[%c0_6, %c0_7] : memref<16x6xf32, #tpu.memory_space<vmem>>, vector<16x6xf32>
    %7 = arith.truncf %6 : vector<16x6xf32> to vector<16x6xbf16>
    %8 = arith.truncf %0 : vector<6x128xf32> to vector<6x128xbf16>
    %cst = arith.constant dense<0.000000e+00> : vector<16x128xf32>
    %9 = tpu.matmul %7, %8, %cst {dimension_numbers = #tpu.dot_dimension_numbers<[1], [0], [0], [1], [0, 0, 1, 1], [], []>} : vector<16x6xbf16>, vector<6x128xbf16>, vector<16x128xf32> -> vector<16x128xf32>
    %10 = vector.extract_strided_slice %4 {offsets = [0, 0], sizes = [1, 128], strides = [1, 1]} : vector<8x128xf32> to vector<1x128xf32>
    %11 = vector.broadcast %10 : vector<1x128xf32> to vector<16x128xf32>
    %12 = arith.addf %9, %11 : vector<16x128xf32>
    %cst_8 = arith.constant 5.000000e-01 : f32
    %13 = vector.broadcast %cst_8 : f32 to vector<16x128xf32>
    %14 = arith.mulf %13, %12 : vector<16x128xf32>
    %cst_9 = arith.constant 4.471500e-02 : f32
    %15 = vector.broadcast %cst_9 : f32 to vector<16x128xf32>
    %16 = arith.mulf %15, %12 : vector<16x128xf32>
    %17 = arith.mulf %16, %12 : vector<16x128xf32>
    %18 = arith.mulf %17, %12 : vector<16x128xf32>
    %19 = arith.addf %12, %18 : vector<16x128xf32>
    %cst_10 = arith.constant 0.797884583 : f32
    %20 = vector.broadcast %cst_10 : f32 to vector<16x128xf32>
    %21 = arith.mulf %20, %19 : vector<16x128xf32>
    %22 = math.tanh %21 : vector<16x128xf32>
    %cst_11 = arith.constant 1.000000e+00 : f32
    %23 = vector.broadcast %cst_11 : f32 to vector<16x128xf32>
    %24 = arith.addf %23, %22 : vector<16x128xf32>
    %25 = arith.mulf %14, %24 : vector<16x128xf32>
    %26 = vector.extract_strided_slice %4 {offsets = [1, 0], sizes = [1, 128], strides = [1, 1]} : vector<8x128xf32> to vector<1x128xf32>
    %27 = vector.extract_strided_slice %4 {offsets = [2, 0], sizes = [1, 128], strides = [1, 1]} : vector<8x128xf32> to vector<1x128xf32>
    %28 = arith.mulf %25, %25 : vector<16x128xf32>
    %29 = tpu.concatenate %25, %28 in 1 : vector<16x128xf32>, vector<16x128xf32> -> vector<16x256xf32>
    %cst_12 = arith.constant 1.000000e+00 : f32
    %30 = vector.broadcast %cst_12 : f32 to vector<1x16xf32>
    %cst_13 = arith.constant dense<0.000000e+00> : vector<1x256xf32>
    %31 = tpu.matmul %30, %29, %cst_13 {dimension_numbers = #tpu.dot_dimension_numbers<[1], [0], [0], [1], [0, 0, 1, 1], [], []>} : vector<1x16xf32>, vector<16x256xf32>, vector<1x256xf32> -> vector<1x256xf32>
    %32 = vector.extract_strided_slice %31 {offsets = [0, 0], sizes = [1, 128], strides = [1, 1]} : vector<1x256xf32> to vector<1x128xf32>
    %cst_14 = arith.constant 6.250000e-02 : f32
    %33 = vector.broadcast %cst_14 : f32 to vector<1x128xf32>
    %34 = arith.mulf %32, %33 : vector<1x128xf32>
    %35 = vector.extract_strided_slice %31 {offsets = [0, 128], sizes = [1, 128], strides = [1, 1]} : vector<1x256xf32> to vector<1x128xf32>
    %cst_15 = arith.constant 6.250000e-02 : f32
    %36 = vector.broadcast %cst_15 : f32 to vector<1x128xf32>
    %37 = arith.mulf %35, %36 : vector<1x128xf32>
    %38 = arith.mulf %34, %34 : vector<1x128xf32>
    %39 = arith.subf %37, %38 : vector<1x128xf32>
    %cst_16 = arith.constant 0.000000e+00 : f32
    %40 = vector.broadcast %cst_16 : f32 to vector<1x128xf32>
    %41 = arith.maximumf %39, %40 : vector<1x128xf32>
    %cst_17 = arith.constant 9.99999974E-6 : f32
    %42 = vector.broadcast %cst_17 : f32 to vector<1x128xf32>
    %43 = arith.addf %41, %42 : vector<1x128xf32>
    %44 = math.rsqrt %43 : vector<1x128xf32>
    %45 = arith.mulf %26, %44 : vector<1x128xf32>
    %46 = arith.mulf %34, %45 : vector<1x128xf32>
    %47 = arith.subf %27, %46 : vector<1x128xf32>
    %48 = vector.broadcast %45 : vector<1x128xf32> to vector<16x128xf32>
    %49 = arith.mulf %25, %48 : vector<16x128xf32>
    %50 = vector.broadcast %47 : vector<1x128xf32> to vector<16x128xf32>
    %51 = arith.addf %49, %50 : vector<16x128xf32>
    %52 = vector.extract_strided_slice %51 {offsets = [0, 0], sizes = [16, 32], strides = [1, 1]} : vector<16x128xf32> to vector<16x32xf32>
    %53 = arith.truncf %52 : vector<16x32xf32> to vector<16x32xbf16>
    %54 = arith.truncf %1 : vector<32x128xf32> to vector<32x128xbf16>
    %cst_18 = arith.constant dense<0.000000e+00> : vector<16x128xf32>
    %55 = tpu.matmul %53, %54, %cst_18 {dimension_numbers = #tpu.dot_dimension_numbers<[1], [0], [0], [1], [0, 0, 1, 1], [], []>} : vector<16x32xbf16>, vector<32x128xbf16>, vector<16x128xf32> -> vector<16x128xf32>
    %56 = vector.extract_strided_slice %4 {offsets = [3, 0], sizes = [1, 128], strides = [1, 1]} : vector<8x128xf32> to vector<1x128xf32>
    %57 = vector.broadcast %56 : vector<1x128xf32> to vector<16x128xf32>
    %58 = arith.addf %55, %57 : vector<16x128xf32>
    %59 = vector.extract_strided_slice %4 {offsets = [4, 0], sizes = [1, 128], strides = [1, 1]} : vector<8x128xf32> to vector<1x128xf32>
    %60 = vector.extract_strided_slice %4 {offsets = [5, 0], sizes = [1, 128], strides = [1, 1]} : vector<8x128xf32> to vector<1x128xf32>
    %cst_19 = arith.constant dense<0.000000e+00> : vector<16xf32>
    %61 = vector.multi_reduction <add>, %58, %cst_19 [1] : vector<16x128xf32> to vector<16xf32>
    %62 = vector.shape_cast %61 : vector<16xf32> to vector<16x1xf32>
    %cst_20 = arith.constant 3.125000e-02 : f32
    %63 = vector.broadcast %cst_20 : f32 to vector<16x1xf32>
    %64 = arith.mulf %62, %63 : vector<16x1xf32>
    %65 = arith.mulf %58, %58 : vector<16x128xf32>
    %cst_21 = arith.constant dense<0.000000e+00> : vector<16xf32>
    %66 = vector.multi_reduction <add>, %65, %cst_21 [1] : vector<16x128xf32> to vector<16xf32>
    %67 = vector.shape_cast %66 : vector<16xf32> to vector<16x1xf32>
    %cst_22 = arith.constant 3.125000e-02 : f32
    %68 = vector.broadcast %cst_22 : f32 to vector<16x1xf32>
    %69 = arith.mulf %67, %68 : vector<16x1xf32>
    %70 = arith.mulf %64, %64 : vector<16x1xf32>
    %71 = arith.subf %69, %70 : vector<16x1xf32>
    %cst_23 = arith.constant 0.000000e+00 : f32
    %72 = vector.broadcast %cst_23 : f32 to vector<16x1xf32>
    %73 = arith.maximumf %71, %72 : vector<16x1xf32>
    %74 = vector.broadcast %64 : vector<16x1xf32> to vector<16x128xf32>
    %75 = arith.subf %58, %74 : vector<16x128xf32>
    %cst_24 = arith.constant 9.99999974E-6 : f32
    %76 = vector.broadcast %cst_24 : f32 to vector<16x1xf32>
    %77 = arith.addf %73, %76 : vector<16x1xf32>
    %78 = math.rsqrt %77 : vector<16x1xf32>
    %79 = vector.broadcast %78 : vector<16x1xf32> to vector<16x128xf32>
    %80 = arith.mulf %75, %79 : vector<16x128xf32>
    %81 = vector.broadcast %59 : vector<1x128xf32> to vector<16x128xf32>
    %82 = arith.mulf %80, %81 : vector<16x128xf32>
    %83 = vector.broadcast %60 : vector<1x128xf32> to vector<16x128xf32>
    %84 = arith.addf %82, %83 : vector<16x128xf32>
    %85 = vector.extract_strided_slice %84 {offsets = [0, 0], sizes = [16, 32], strides = [1, 1]} : vector<16x128xf32> to vector<16x32xf32>
    %86 = arith.truncf %85 : vector<16x32xf32> to vector<16x32xbf16>
    %87 = arith.truncf %2 : vector<32x128xf32> to vector<32x128xbf16>
    %cst_25 = arith.constant dense<0.000000e+00> : vector<16x128xf32>
    %88 = tpu.matmul %86, %87, %cst_25 {dimension_numbers = #tpu.dot_dimension_numbers<[1], [0], [0], [1], [0, 0, 1, 1], [], []>} : vector<16x32xbf16>, vector<32x128xbf16>, vector<16x128xf32> -> vector<16x128xf32>
    %89 = vector.extract_strided_slice %5 {offsets = [0, 0], sizes = [1, 128], strides = [1, 1]} : vector<8x128xf32> to vector<1x128xf32>
    %90 = vector.broadcast %89 : vector<1x128xf32> to vector<16x128xf32>
    %91 = arith.addf %88, %90 : vector<16x128xf32>
    %cst_26 = arith.constant 5.000000e-01 : f32
    %92 = vector.broadcast %cst_26 : f32 to vector<16x128xf32>
    %93 = arith.mulf %92, %91 : vector<16x128xf32>
    %cst_27 = arith.constant 4.471500e-02 : f32
    %94 = vector.broadcast %cst_27 : f32 to vector<16x128xf32>
    %95 = arith.mulf %94, %91 : vector<16x128xf32>
    %96 = arith.mulf %95, %91 : vector<16x128xf32>
    %97 = arith.mulf %96, %91 : vector<16x128xf32>
    %98 = arith.addf %91, %97 : vector<16x128xf32>
    %cst_28 = arith.constant 0.797884583 : f32
    %99 = vector.broadcast %cst_28 : f32 to vector<16x128xf32>
    %100 = arith.mulf %99, %98 : vector<16x128xf32>
    %101 = math.tanh %100 : vector<16x128xf32>
    %cst_29 = arith.constant 1.000000e+00 : f32
    %102 = vector.broadcast %cst_29 : f32 to vector<16x128xf32>
    %103 = arith.addf %102, %101 : vector<16x128xf32>
    %104 = arith.mulf %93, %103 : vector<16x128xf32>
    %105 = vector.extract_strided_slice %5 {offsets = [1, 0], sizes = [1, 128], strides = [1, 1]} : vector<8x128xf32> to vector<1x128xf32>
    %106 = vector.extract_strided_slice %5 {offsets = [2, 0], sizes = [1, 128], strides = [1, 1]} : vector<8x128xf32> to vector<1x128xf32>
    %107 = arith.mulf %104, %104 : vector<16x128xf32>
    %108 = tpu.concatenate %104, %107 in 1 : vector<16x128xf32>, vector<16x128xf32> -> vector<16x256xf32>
    %cst_30 = arith.constant 1.000000e+00 : f32
    %109 = vector.broadcast %cst_30 : f32 to vector<1x16xf32>
    %cst_31 = arith.constant dense<0.000000e+00> : vector<1x256xf32>
    %110 = tpu.matmul %109, %108, %cst_31 {dimension_numbers = #tpu.dot_dimension_numbers<[1], [0], [0], [1], [0, 0, 1, 1], [], []>} : vector<1x16xf32>, vector<16x256xf32>, vector<1x256xf32> -> vector<1x256xf32>
    %111 = vector.extract_strided_slice %110 {offsets = [0, 0], sizes = [1, 128], strides = [1, 1]} : vector<1x256xf32> to vector<1x128xf32>
    %cst_32 = arith.constant 6.250000e-02 : f32
    %112 = vector.broadcast %cst_32 : f32 to vector<1x128xf32>
    %113 = arith.mulf %111, %112 : vector<1x128xf32>
    %114 = vector.extract_strided_slice %110 {offsets = [0, 128], sizes = [1, 128], strides = [1, 1]} : vector<1x256xf32> to vector<1x128xf32>
    %cst_33 = arith.constant 6.250000e-02 : f32
    %115 = vector.broadcast %cst_33 : f32 to vector<1x128xf32>
    %116 = arith.mulf %114, %115 : vector<1x128xf32>
    %117 = arith.mulf %113, %113 : vector<1x128xf32>
    %118 = arith.subf %116, %117 : vector<1x128xf32>
    %cst_34 = arith.constant 0.000000e+00 : f32
    %119 = vector.broadcast %cst_34 : f32 to vector<1x128xf32>
    %120 = arith.maximumf %118, %119 : vector<1x128xf32>
    %cst_35 = arith.constant 9.99999974E-6 : f32
    %121 = vector.broadcast %cst_35 : f32 to vector<1x128xf32>
    %122 = arith.addf %120, %121 : vector<1x128xf32>
    %123 = math.rsqrt %122 : vector<1x128xf32>
    %124 = arith.mulf %105, %123 : vector<1x128xf32>
    %125 = arith.mulf %113, %124 : vector<1x128xf32>
    %126 = arith.subf %106, %125 : vector<1x128xf32>
    %127 = vector.broadcast %124 : vector<1x128xf32> to vector<16x128xf32>
    %128 = arith.mulf %104, %127 : vector<16x128xf32>
    %129 = vector.broadcast %126 : vector<1x128xf32> to vector<16x128xf32>
    %130 = arith.addf %128, %129 : vector<16x128xf32>
    %131 = vector.extract_strided_slice %130 {offsets = [0, 0], sizes = [16, 32], strides = [1, 1]} : vector<16x128xf32> to vector<16x32xf32>
    %132 = arith.truncf %131 : vector<16x32xf32> to vector<16x32xbf16>
    %133 = arith.truncf %3 : vector<32x128xf32> to vector<32x128xbf16>
    %cst_36 = arith.constant dense<0.000000e+00> : vector<16x128xf32>
    %134 = tpu.matmul %132, %133, %cst_36 {dimension_numbers = #tpu.dot_dimension_numbers<[1], [0], [0], [1], [0, 0, 1, 1], [], []>} : vector<16x32xbf16>, vector<32x128xbf16>, vector<16x128xf32> -> vector<16x128xf32>
    %135 = vector.extract_strided_slice %5 {offsets = [3, 0], sizes = [1, 128], strides = [1, 1]} : vector<8x128xf32> to vector<1x128xf32>
    %136 = vector.broadcast %135 : vector<1x128xf32> to vector<16x128xf32>
    %137 = arith.addf %134, %136 : vector<16x128xf32>
    %c0_37 = arith.constant 0 : index
    %c0_38 = arith.constant 0 : index
    %138 = vector.load %arg4[%c0_37, %c0_38] : memref<48x128xf32, #tpu.memory_space<vmem>>, vector<16x128xf32>
    tpu.vector_store %arg4[%c0_37, %c0_38], %137 {strides = array<i32>} : memref<48x128xf32, #tpu.memory_space<vmem>>, vector<16x128xf32>,
    %c120 = arith.constant 120 : index
    %c0_39 = arith.constant 0 : index
    %139 = vector.load %arg3[%c120, %c0_39] : memref<360x128xf32, #tpu.memory_space<vmem>>, vector<4x128xf32>
    %c128 = arith.constant 128 : index
    %c0_40 = arith.constant 0 : index
    %140 = vector.load %arg3[%c128, %c0_40] : memref<360x128xf32, #tpu.memory_space<vmem>>, vector<32x128xf32>
    %c160 = arith.constant 160 : index
    %c0_41 = arith.constant 0 : index
    %141 = vector.load %arg3[%c160, %c0_41] : memref<360x128xf32, #tpu.memory_space<vmem>>, vector<32x128xf32>
    %c192 = arith.constant 192 : index
    %c0_42 = arith.constant 0 : index
    %142 = vector.load %arg3[%c192, %c0_42] : memref<360x128xf32, #tpu.memory_space<vmem>>, vector<32x128xf32>
    %c224 = arith.constant 224 : index
    %c0_43 = arith.constant 0 : index
    %143 = vector.load %arg3[%c224, %c0_43] : memref<360x128xf32, #tpu.memory_space<vmem>>, vector<8x128xf32>
    %c232 = arith.constant 232 : index
    %c0_44 = arith.constant 0 : index
    %144 = vector.load %arg3[%c232, %c0_44] : memref<360x128xf32, #tpu.memory_space<vmem>>, vector<8x128xf32>
    %c0_45 = arith.constant 0 : index
    %c0_46 = arith.constant 0 : index
    %145 = vector.load %arg1[%c0_45, %c0_46] : memref<24x4xf32, #tpu.memory_space<vmem>>, vector<24x4xf32>
    %146 = arith.truncf %145 : vector<24x4xf32> to vector<24x4xbf16>
    %147 = arith.truncf %139 : vector<4x128xf32> to vector<4x128xbf16>
    %cst_47 = arith.constant dense<0.000000e+00> : vector<24x128xf32>
    %148 = tpu.matmul %146, %147, %cst_47 {dimension_numbers = #tpu.dot_dimension_numbers<[1], [0], [0], [1], [0, 0, 1, 1], [], []>} : vector<24x4xbf16>, vector<4x128xbf16>, vector<24x128xf32> -> vector<24x128xf32>
    %149 = vector.extract_strided_slice %143 {offsets = [0, 0], sizes = [1, 128], strides = [1, 1]} : vector<8x128xf32> to vector<1x128xf32>
    %150 = vector.broadcast %149 : vector<1x128xf32> to vector<24x128xf32>
    %151 = arith.addf %148, %150 : vector<24x128xf32>
    %cst_48 = arith.constant 5.000000e-01 : f32
    %152 = vector.broadcast %cst_48 : f32 to vector<24x128xf32>
    %153 = arith.mulf %152, %151 : vector<24x128xf32>
    %cst_49 = arith.constant 4.471500e-02 : f32
    %154 = vector.broadcast %cst_49 : f32 to vector<24x128xf32>
    %155 = arith.mulf %154, %151 : vector<24x128xf32>
    %156 = arith.mulf %155, %151 : vector<24x128xf32>
    %157 = arith.mulf %156, %151 : vector<24x128xf32>
    %158 = arith.addf %151, %157 : vector<24x128xf32>
    %cst_50 = arith.constant 0.797884583 : f32
    %159 = vector.broadcast %cst_50 : f32 to vector<24x128xf32>
    %160 = arith.mulf %159, %158 : vector<24x128xf32>
    %161 = math.tanh %160 : vector<24x128xf32>
    %cst_51 = arith.constant 1.000000e+00 : f32
    %162 = vector.broadcast %cst_51 : f32 to vector<24x128xf32>
    %163 = arith.addf %162, %161 : vector<24x128xf32>
    %164 = arith.mulf %153, %163 : vector<24x128xf32>
    %165 = vector.extract_strided_slice %143 {offsets = [1, 0], sizes = [1, 128], strides = [1, 1]} : vector<8x128xf32> to vector<1x128xf32>
    %166 = vector.extract_strided_slice %143 {offsets = [2, 0], sizes = [1, 128], strides = [1, 1]} : vector<8x128xf32> to vector<1x128xf32>
    %167 = arith.mulf %164, %164 : vector<24x128xf32>
    %168 = tpu.concatenate %164, %167 in 1 : vector<24x128xf32>, vector<24x128xf32> -> vector<24x256xf32>
    %cst_52 = arith.constant 1.000000e+00 : f32
    %169 = vector.broadcast %cst_52 : f32 to vector<1x24xf32>
    %cst_53 = arith.constant dense<0.000000e+00> : vector<1x256xf32>
    %170 = tpu.matmul %169, %168, %cst_53 {dimension_numbers = #tpu.dot_dimension_numbers<[1], [0], [0], [1], [0, 0, 1, 1], [], []>} : vector<1x24xf32>, vector<24x256xf32>, vector<1x256xf32> -> vector<1x256xf32>
    %171 = vector.extract_strided_slice %170 {offsets = [0, 0], sizes = [1, 128], strides = [1, 1]} : vector<1x256xf32> to vector<1x128xf32>
    %cst_54 = arith.constant 0.0416666679 : f32
    %172 = vector.broadcast %cst_54 : f32 to vector<1x128xf32>
    %173 = arith.mulf %171, %172 : vector<1x128xf32>
    %174 = vector.extract_strided_slice %170 {offsets = [0, 128], sizes = [1, 128], strides = [1, 1]} : vector<1x256xf32> to vector<1x128xf32>
    %cst_55 = arith.constant 0.0416666679 : f32
    %175 = vector.broadcast %cst_55 : f32 to vector<1x128xf32>
    %176 = arith.mulf %174, %175 : vector<1x128xf32>
    %177 = arith.mulf %173, %173 : vector<1x128xf32>
    %178 = arith.subf %176, %177 : vector<1x128xf32>
    %cst_56 = arith.constant 0.000000e+00 : f32
    %179 = vector.broadcast %cst_56 : f32 to vector<1x128xf32>
    %180 = arith.maximumf %178, %179 : vector<1x128xf32>
    %cst_57 = arith.constant 9.99999974E-6 : f32
    %181 = vector.broadcast %cst_57 : f32 to vector<1x128xf32>
    %182 = arith.addf %180, %181 : vector<1x128xf32>
    %183 = math.rsqrt %182 : vector<1x128xf32>
    %184 = arith.mulf %165, %183 : vector<1x128xf32>
    %185 = arith.mulf %173, %184 : vector<1x128xf32>
    %186 = arith.subf %166, %185 : vector<1x128xf32>
    %187 = vector.broadcast %184 : vector<1x128xf32> to vector<24x128xf32>
    %188 = arith.mulf %164, %187 : vector<24x128xf32>
    %189 = vector.broadcast %186 : vector<1x128xf32> to vector<24x128xf32>
    %190 = arith.addf %188, %189 : vector<24x128xf32>
    %191 = vector.extract_strided_slice %190 {offsets = [0, 0], sizes = [24, 32], strides = [1, 1]} : vector<24x128xf32> to vector<24x32xf32>
    %192 = arith.truncf %191 : vector<24x32xf32> to vector<24x32xbf16>
    %193 = arith.truncf %140 : vector<32x128xf32> to vector<32x128xbf16>
    %cst_58 = arith.constant dense<0.000000e+00> : vector<24x128xf32>
    %194 = tpu.matmul %192, %193, %cst_58 {dimension_numbers = #tpu.dot_dimension_numbers<[1], [0], [0], [1], [0, 0, 1, 1], [], []>} : vector<24x32xbf16>, vector<32x128xbf16>, vector<24x128xf32> -> vector<24x128xf32>
    %195 = vector.extract_strided_slice %143 {offsets = [3, 0], sizes = [1, 128], strides = [1, 1]} : vector<8x128xf32> to vector<1x128xf32>
    %196 = vector.broadcast %195 : vector<1x128xf32> to vector<24x128xf32>
    %197 = arith.addf %194, %196 : vector<24x128xf32>
    %198 = vector.extract_strided_slice %143 {offsets = [4, 0], sizes = [1, 128], strides = [1, 1]} : vector<8x128xf32> to vector<1x128xf32>
    %199 = vector.extract_strided_slice %143 {offsets = [5, 0], sizes = [1, 128], strides = [1, 1]} : vector<8x128xf32> to vector<1x128xf32>
    %cst_59 = arith.constant dense<0.000000e+00> : vector<24xf32>
    %200 = vector.multi_reduction <add>, %197, %cst_59 [1] : vector<24x128xf32> to vector<24xf32>
    %201 = vector.shape_cast %200 : vector<24xf32> to vector<24x1xf32>
    %cst_60 = arith.constant 3.125000e-02 : f32
    %202 = vector.broadcast %cst_60 : f32 to vector<24x1xf32>
    %203 = arith.mulf %201, %202 : vector<24x1xf32>
    %204 = arith.mulf %197, %197 : vector<24x128xf32>
    %cst_61 = arith.constant dense<0.000000e+00> : vector<24xf32>
    %205 = vector.multi_reduction <add>, %204, %cst_61 [1] : vector<24x128xf32> to vector<24xf32>
    %206 = vector.shape_cast %205 : vector<24xf32> to vector<24x1xf32>
    %cst_62 = arith.constant 3.125000e-02 : f32
    %207 = vector.broadcast %cst_62 : f32 to vector<24x1xf32>
    %208 = arith.mulf %206, %207 : vector<24x1xf32>
    %209 = arith.mulf %203, %203 : vector<24x1xf32>
    %210 = arith.subf %208, %209 : vector<24x1xf32>
    %cst_63 = arith.constant 0.000000e+00 : f32
    %211 = vector.broadcast %cst_63 : f32 to vector<24x1xf32>
    %212 = arith.maximumf %210, %211 : vector<24x1xf32>
    %213 = vector.broadcast %203 : vector<24x1xf32> to vector<24x128xf32>
    %214 = arith.subf %197, %213 : vector<24x128xf32>
    %cst_64 = arith.constant 9.99999974E-6 : f32
    %215 = vector.broadcast %cst_64 : f32 to vector<24x1xf32>
    %216 = arith.addf %212, %215 : vector<24x1xf32>
    %217 = math.rsqrt %216 : vector<24x1xf32>
    %218 = vector.broadcast %217 : vector<24x1xf32> to vector<24x128xf32>
    %219 = arith.mulf %214, %218 : vector<24x128xf32>
    %220 = vector.broadcast %198 : vector<1x128xf32> to vector<24x128xf32>
    %221 = arith.mulf %219, %220 : vector<24x128xf32>
    %222 = vector.broadcast %199 : vector<1x128xf32> to vector<24x128xf32>
    %223 = arith.addf %221, %222 : vector<24x128xf32>
    %224 = vector.extract_strided_slice %223 {offsets = [0, 0], sizes = [24, 32], strides = [1, 1]} : vector<24x128xf32> to vector<24x32xf32>
    %225 = arith.truncf %224 : vector<24x32xf32> to vector<24x32xbf16>
    %226 = arith.truncf %141 : vector<32x128xf32> to vector<32x128xbf16>
    %cst_65 = arith.constant dense<0.000000e+00> : vector<24x128xf32>
    %227 = tpu.matmul %225, %226, %cst_65 {dimension_numbers = #tpu.dot_dimension_numbers<[1], [0], [0], [1], [0, 0, 1, 1], [], []>} : vector<24x32xbf16>, vector<32x128xbf16>, vector<24x128xf32> -> vector<24x128xf32>
    %228 = vector.extract_strided_slice %144 {offsets = [0, 0], sizes = [1, 128], strides = [1, 1]} : vector<8x128xf32> to vector<1x128xf32>
    %229 = vector.broadcast %228 : vector<1x128xf32> to vector<24x128xf32>
    %230 = arith.addf %227, %229 : vector<24x128xf32>
    %cst_66 = arith.constant 5.000000e-01 : f32
    %231 = vector.broadcast %cst_66 : f32 to vector<24x128xf32>
    %232 = arith.mulf %231, %230 : vector<24x128xf32>
    %cst_67 = arith.constant 4.471500e-02 : f32
    %233 = vector.broadcast %cst_67 : f32 to vector<24x128xf32>
    %234 = arith.mulf %233, %230 : vector<24x128xf32>
    %235 = arith.mulf %234, %230 : vector<24x128xf32>
    %236 = arith.mulf %235, %230 : vector<24x128xf32>
    %237 = arith.addf %230, %236 : vector<24x128xf32>
    %cst_68 = arith.constant 0.797884583 : f32
    %238 = vector.broadcast %cst_68 : f32 to vector<24x128xf32>
    %239 = arith.mulf %238, %237 : vector<24x128xf32>
    %240 = math.tanh %239 : vector<24x128xf32>
    %cst_69 = arith.constant 1.000000e+00 : f32
    %241 = vector.broadcast %cst_69 : f32 to vector<24x128xf32>
    %242 = arith.addf %241, %240 : vector<24x128xf32>
    %243 = arith.mulf %232, %242 : vector<24x128xf32>
    %244 = vector.extract_strided_slice %144 {offsets = [1, 0], sizes = [1, 128], strides = [1, 1]} : vector<8x128xf32> to vector<1x128xf32>
    %245 = vector.extract_strided_slice %144 {offsets = [2, 0], sizes = [1, 128], strides = [1, 1]} : vector<8x128xf32> to vector<1x128xf32>
    %246 = arith.mulf %243, %243 : vector<24x128xf32>
    %247 = tpu.concatenate %243, %246 in 1 : vector<24x128xf32>, vector<24x128xf32> -> vector<24x256xf32>
    %cst_70 = arith.constant 1.000000e+00 : f32
    %248 = vector.broadcast %cst_70 : f32 to vector<1x24xf32>
    %cst_71 = arith.constant dense<0.000000e+00> : vector<1x256xf32>
    %249 = tpu.matmul %248, %247, %cst_71 {dimension_numbers = #tpu.dot_dimension_numbers<[1], [0], [0], [1], [0, 0, 1, 1], [], []>} : vector<1x24xf32>, vector<24x256xf32>, vector<1x256xf32> -> vector<1x256xf32>
    %250 = vector.extract_strided_slice %249 {offsets = [0, 0], sizes = [1, 128], strides = [1, 1]} : vector<1x256xf32> to vector<1x128xf32>
    %cst_72 = arith.constant 0.0416666679 : f32
    %251 = vector.broadcast %cst_72 : f32 to vector<1x128xf32>
    %252 = arith.mulf %250, %251 : vector<1x128xf32>
    %253 = vector.extract_strided_slice %249 {offsets = [0, 128], sizes = [1, 128], strides = [1, 1]} : vector<1x256xf32> to vector<1x128xf32>
    %cst_73 = arith.constant 0.0416666679 : f32
    %254 = vector.broadcast %cst_73 : f32 to vector<1x128xf32>
    %255 = arith.mulf %253, %254 : vector<1x128xf32>
    %256 = arith.mulf %252, %252 : vector<1x128xf32>
    %257 = arith.subf %255, %256 : vector<1x128xf32>
    %cst_74 = arith.constant 0.000000e+00 : f32
    %258 = vector.broadcast %cst_74 : f32 to vector<1x128xf32>
    %259 = arith.maximumf %257, %258 : vector<1x128xf32>
    %cst_75 = arith.constant 9.99999974E-6 : f32
    %260 = vector.broadcast %cst_75 : f32 to vector<1x128xf32>
    %261 = arith.addf %259, %260 : vector<1x128xf32>
    %262 = math.rsqrt %261 : vector<1x128xf32>
    %263 = arith.mulf %244, %262 : vector<1x128xf32>
    %264 = arith.mulf %252, %263 : vector<1x128xf32>
    %265 = arith.subf %245, %264 : vector<1x128xf32>
    %266 = vector.broadcast %263 : vector<1x128xf32> to vector<24x128xf32>
    %267 = arith.mulf %243, %266 : vector<24x128xf32>
    %268 = vector.broadcast %265 : vector<1x128xf32> to vector<24x128xf32>
    %269 = arith.addf %267, %268 : vector<24x128xf32>
    %270 = vector.extract_strided_slice %269 {offsets = [0, 0], sizes = [24, 32], strides = [1, 1]} : vector<24x128xf32> to vector<24x32xf32>
    %271 = arith.truncf %270 : vector<24x32xf32> to vector<24x32xbf16>
    %272 = arith.truncf %142 : vector<32x128xf32> to vector<32x128xbf16>
    %cst_76 = arith.constant dense<0.000000e+00> : vector<24x128xf32>
    %273 = tpu.matmul %271, %272, %cst_76 {dimension_numbers = #tpu.dot_dimension_numbers<[1], [0], [0], [1], [0, 0, 1, 1], [], []>} : vector<24x32xbf16>, vector<32x128xbf16>, vector<24x128xf32> -> vector<24x128xf32>
    %274 = vector.extract_strided_slice %144 {offsets = [3, 0], sizes = [1, 128], strides = [1, 1]} : vector<8x128xf32> to vector<1x128xf32>
    %275 = vector.broadcast %274 : vector<1x128xf32> to vector<24x128xf32>
    %276 = arith.addf %273, %275 : vector<24x128xf32>
    %c16 = arith.constant 16 : index
    %c0_77 = arith.constant 0 : index
    %277 = vector.load %arg4[%c16, %c0_77] : memref<48x128xf32, #tpu.memory_space<vmem>>, vector<24x128xf32>
    tpu.vector_store %arg4[%c16, %c0_77], %276 {strides = array<i32>} : memref<48x128xf32, #tpu.memory_space<vmem>>, vector<24x128xf32>,
    %c240 = arith.constant 240 : index
    %c0_78 = arith.constant 0 : index
    %278 = vector.load %arg3[%c240, %c0_78] : memref<360x128xf32, #tpu.memory_space<vmem>>, vector<3x128xf32>
    %c248 = arith.constant 248 : index
    %c0_79 = arith.constant 0 : index
    %279 = vector.load %arg3[%c248, %c0_79] : memref<360x128xf32, #tpu.memory_space<vmem>>, vector<32x128xf32>
    %c280 = arith.constant 280 : index
    %c0_80 = arith.constant 0 : index
    %280 = vector.load %arg3[%c280, %c0_80] : memref<360x128xf32, #tpu.memory_space<vmem>>, vector<32x128xf32>
    %c312 = arith.constant 312 : index
    %c0_81 = arith.constant 0 : index
    %281 = vector.load %arg3[%c312, %c0_81] : memref<360x128xf32, #tpu.memory_space<vmem>>, vector<32x128xf32>
    %c344 = arith.constant 344 : index
    %c0_82 = arith.constant 0 : index
    %282 = vector.load %arg3[%c344, %c0_82] : memref<360x128xf32, #tpu.memory_space<vmem>>, vector<8x128xf32>
    %c352 = arith.constant 352 : index
    %c0_83 = arith.constant 0 : index
    %283 = vector.load %arg3[%c352, %c0_83] : memref<360x128xf32, #tpu.memory_space<vmem>>, vector<8x128xf32>
    %c0_84 = arith.constant 0 : index
    %c0_85 = arith.constant 0 : index
    %284 = vector.load %arg2[%c0_84, %c0_85] : memref<4x3xf32, #tpu.memory_space<vmem>>, vector<4x3xf32>
    %285 = arith.truncf %284 : vector<4x3xf32> to vector<4x3xbf16>
    %286 = arith.truncf %278 : vector<3x128xf32> to vector<3x128xbf16>
    %cst_86 = arith.constant dense<0.000000e+00> : vector<4x128xf32>
    %287 = tpu.matmul %285, %286, %cst_86 {dimension_numbers = #tpu.dot_dimension_numbers<[1], [0], [0], [1], [0, 0, 1, 1], [], []>} : vector<4x3xbf16>, vector<3x128xbf16>, vector<4x128xf32> -> vector<4x128xf32>
    %288 = vector.extract_strided_slice %282 {offsets = [0, 0], sizes = [1, 128], strides = [1, 1]} : vector<8x128xf32> to vector<1x128xf32>
    %289 = vector.broadcast %288 : vector<1x128xf32> to vector<4x128xf32>
    %290 = arith.addf %287, %289 : vector<4x128xf32>
    %cst_87 = arith.constant 5.000000e-01 : f32
    %291 = vector.broadcast %cst_87 : f32 to vector<4x128xf32>
    %292 = arith.mulf %291, %290 : vector<4x128xf32>
    %cst_88 = arith.constant 4.471500e-02 : f32
    %293 = vector.broadcast %cst_88 : f32 to vector<4x128xf32>
    %294 = arith.mulf %293, %290 : vector<4x128xf32>
    %295 = arith.mulf %294, %290 : vector<4x128xf32>
    %296 = arith.mulf %295, %290 : vector<4x128xf32>
    %297 = arith.addf %290, %296 : vector<4x128xf32>
    %cst_89 = arith.constant 0.797884583 : f32
    %298 = vector.broadcast %cst_89 : f32 to vector<4x128xf32>
    %299 = arith.mulf %298, %297 : vector<4x128xf32>
    %300 = math.tanh %299 : vector<4x128xf32>
    %cst_90 = arith.constant 1.000000e+00 : f32
    %301 = vector.broadcast %cst_90 : f32 to vector<4x128xf32>
    %302 = arith.addf %301, %300 : vector<4x128xf32>
    %303 = arith.mulf %292, %302 : vector<4x128xf32>
    %304 = vector.extract_strided_slice %282 {offsets = [1, 0], sizes = [1, 128], strides = [1, 1]} : vector<8x128xf32> to vector<1x128xf32>
    %305 = vector.extract_strided_slice %282 {offsets = [2, 0], sizes = [1, 128], strides = [1, 1]} : vector<8x128xf32> to vector<1x128xf32>
    %306 = arith.mulf %303, %303 : vector<4x128xf32>
    %307 = tpu.concatenate %303, %306 in 1 : vector<4x128xf32>, vector<4x128xf32> -> vector<4x256xf32>
    %cst_91 = arith.constant 1.000000e+00 : f32
    %308 = vector.broadcast %cst_91 : f32 to vector<1x4xf32>
    %cst_92 = arith.constant dense<0.000000e+00> : vector<1x256xf32>
    %309 = tpu.matmul %308, %307, %cst_92 {dimension_numbers = #tpu.dot_dimension_numbers<[1], [0], [0], [1], [0, 0, 1, 1], [], []>} : vector<1x4xf32>, vector<4x256xf32>, vector<1x256xf32> -> vector<1x256xf32>
    %310 = vector.extract_strided_slice %309 {offsets = [0, 0], sizes = [1, 128], strides = [1, 1]} : vector<1x256xf32> to vector<1x128xf32>
    %cst_93 = arith.constant 2.500000e-01 : f32
    %311 = vector.broadcast %cst_93 : f32 to vector<1x128xf32>
    %312 = arith.mulf %310, %311 : vector<1x128xf32>
    %313 = vector.extract_strided_slice %309 {offsets = [0, 128], sizes = [1, 128], strides = [1, 1]} : vector<1x256xf32> to vector<1x128xf32>
    %cst_94 = arith.constant 2.500000e-01 : f32
    %314 = vector.broadcast %cst_94 : f32 to vector<1x128xf32>
    %315 = arith.mulf %313, %314 : vector<1x128xf32>
    %316 = arith.mulf %312, %312 : vector<1x128xf32>
    %317 = arith.subf %315, %316 : vector<1x128xf32>
    %cst_95 = arith.constant 0.000000e+00 : f32
    %318 = vector.broadcast %cst_95 : f32 to vector<1x128xf32>
    %319 = arith.maximumf %317, %318 : vector<1x128xf32>
    %cst_96 = arith.constant 9.99999974E-6 : f32
    %320 = vector.broadcast %cst_96 : f32 to vector<1x128xf32>
    %321 = arith.addf %319, %320 : vector<1x128xf32>
    %322 = math.rsqrt %321 : vector<1x128xf32>
    %323 = arith.mulf %304, %322 : vector<1x128xf32>
    %324 = arith.mulf %312, %323 : vector<1x128xf32>
    %325 = arith.subf %305, %324 : vector<1x128xf32>
    %326 = vector.broadcast %323 : vector<1x128xf32> to vector<4x128xf32>
    %327 = arith.mulf %303, %326 : vector<4x128xf32>
    %328 = vector.broadcast %325 : vector<1x128xf32> to vector<4x128xf32>
    %329 = arith.addf %327, %328 : vector<4x128xf32>
    %330 = vector.extract_strided_slice %329 {offsets = [0, 0], sizes = [4, 32], strides = [1, 1]} : vector<4x128xf32> to vector<4x32xf32>
    %331 = arith.truncf %330 : vector<4x32xf32> to vector<4x32xbf16>
    %332 = arith.truncf %279 : vector<32x128xf32> to vector<32x128xbf16>
    %cst_97 = arith.constant dense<0.000000e+00> : vector<4x128xf32>
    %333 = tpu.matmul %331, %332, %cst_97 {dimension_numbers = #tpu.dot_dimension_numbers<[1], [0], [0], [1], [0, 0, 1, 1], [], []>} : vector<4x32xbf16>, vector<32x128xbf16>, vector<4x128xf32> -> vector<4x128xf32>
    %334 = vector.extract_strided_slice %282 {offsets = [3, 0], sizes = [1, 128], strides = [1, 1]} : vector<8x128xf32> to vector<1x128xf32>
    %335 = vector.broadcast %334 : vector<1x128xf32> to vector<4x128xf32>
    %336 = arith.addf %333, %335 : vector<4x128xf32>
    %337 = vector.extract_strided_slice %282 {offsets = [4, 0], sizes = [1, 128], strides = [1, 1]} : vector<8x128xf32> to vector<1x128xf32>
    %338 = vector.extract_strided_slice %282 {offsets = [5, 0], sizes = [1, 128], strides = [1, 1]} : vector<8x128xf32> to vector<1x128xf32>
    %cst_98 = arith.constant dense<0.000000e+00> : vector<4xf32>
    %339 = vector.multi_reduction <add>, %336, %cst_98 [1] : vector<4x128xf32> to vector<4xf32>
    %340 = vector.shape_cast %339 : vector<4xf32> to vector<4x1xf32>
    %cst_99 = arith.constant 3.125000e-02 : f32
    %341 = vector.broadcast %cst_99 : f32 to vector<4x1xf32>
    %342 = arith.mulf %340, %341 : vector<4x1xf32>
    %343 = arith.mulf %336, %336 : vector<4x128xf32>
    %cst_100 = arith.constant dense<0.000000e+00> : vector<4xf32>
    %344 = vector.multi_reduction <add>, %343, %cst_100 [1] : vector<4x128xf32> to vector<4xf32>
    %345 = vector.shape_cast %344 : vector<4xf32> to vector<4x1xf32>
    %cst_101 = arith.constant 3.125000e-02 : f32
    %346 = vector.broadcast %cst_101 : f32 to vector<4x1xf32>
    %347 = arith.mulf %345, %346 : vector<4x1xf32>
    %348 = arith.mulf %342, %342 : vector<4x1xf32>
    %349 = arith.subf %347, %348 : vector<4x1xf32>
    %cst_102 = arith.constant 0.000000e+00 : f32
    %350 = vector.broadcast %cst_102 : f32 to vector<4x1xf32>
    %351 = arith.maximumf %349, %350 : vector<4x1xf32>
    %352 = vector.broadcast %342 : vector<4x1xf32> to vector<4x128xf32>
    %353 = arith.subf %336, %352 : vector<4x128xf32>
    %cst_103 = arith.constant 9.99999974E-6 : f32
    %354 = vector.broadcast %cst_103 : f32 to vector<4x1xf32>
    %355 = arith.addf %351, %354 : vector<4x1xf32>
    %356 = math.rsqrt %355 : vector<4x1xf32>
    %357 = vector.broadcast %356 : vector<4x1xf32> to vector<4x128xf32>
    %358 = arith.mulf %353, %357 : vector<4x128xf32>
    %359 = vector.broadcast %337 : vector<1x128xf32> to vector<4x128xf32>
    %360 = arith.mulf %358, %359 : vector<4x128xf32>
    %361 = vector.broadcast %338 : vector<1x128xf32> to vector<4x128xf32>
    %362 = arith.addf %360, %361 : vector<4x128xf32>
    %363 = vector.extract_strided_slice %362 {offsets = [0, 0], sizes = [4, 32], strides = [1, 1]} : vector<4x128xf32> to vector<4x32xf32>
    %364 = arith.truncf %363 : vector<4x32xf32> to vector<4x32xbf16>
    %365 = arith.truncf %280 : vector<32x128xf32> to vector<32x128xbf16>
    %cst_104 = arith.constant dense<0.000000e+00> : vector<4x128xf32>
    %366 = tpu.matmul %364, %365, %cst_104 {dimension_numbers = #tpu.dot_dimension_numbers<[1], [0], [0], [1], [0, 0, 1, 1], [], []>} : vector<4x32xbf16>, vector<32x128xbf16>, vector<4x128xf32> -> vector<4x128xf32>
    %367 = vector.extract_strided_slice %283 {offsets = [0, 0], sizes = [1, 128], strides = [1, 1]} : vector<8x128xf32> to vector<1x128xf32>
    %368 = vector.broadcast %367 : vector<1x128xf32> to vector<4x128xf32>
    %369 = arith.addf %366, %368 : vector<4x128xf32>
    %cst_105 = arith.constant 5.000000e-01 : f32
    %370 = vector.broadcast %cst_105 : f32 to vector<4x128xf32>
    %371 = arith.mulf %370, %369 : vector<4x128xf32>
    %cst_106 = arith.constant 4.471500e-02 : f32
    %372 = vector.broadcast %cst_106 : f32 to vector<4x128xf32>
    %373 = arith.mulf %372, %369 : vector<4x128xf32>
    %374 = arith.mulf %373, %369 : vector<4x128xf32>
    %375 = arith.mulf %374, %369 : vector<4x128xf32>
    %376 = arith.addf %369, %375 : vector<4x128xf32>
    %cst_107 = arith.constant 0.797884583 : f32
    %377 = vector.broadcast %cst_107 : f32 to vector<4x128xf32>
    %378 = arith.mulf %377, %376 : vector<4x128xf32>
    %379 = math.tanh %378 : vector<4x128xf32>
    %cst_108 = arith.constant 1.000000e+00 : f32
    %380 = vector.broadcast %cst_108 : f32 to vector<4x128xf32>
    %381 = arith.addf %380, %379 : vector<4x128xf32>
    %382 = arith.mulf %371, %381 : vector<4x128xf32>
    %383 = vector.extract_strided_slice %283 {offsets = [1, 0], sizes = [1, 128], strides = [1, 1]} : vector<8x128xf32> to vector<1x128xf32>
    %384 = vector.extract_strided_slice %283 {offsets = [2, 0], sizes = [1, 128], strides = [1, 1]} : vector<8x128xf32> to vector<1x128xf32>
    %385 = arith.mulf %382, %382 : vector<4x128xf32>
    %386 = tpu.concatenate %382, %385 in 1 : vector<4x128xf32>, vector<4x128xf32> -> vector<4x256xf32>
    %cst_109 = arith.constant 1.000000e+00 : f32
    %387 = vector.broadcast %cst_109 : f32 to vector<1x4xf32>
    %cst_110 = arith.constant dense<0.000000e+00> : vector<1x256xf32>
    %388 = tpu.matmul %387, %386, %cst_110 {dimension_numbers = #tpu.dot_dimension_numbers<[1], [0], [0], [1], [0, 0, 1, 1], [], []>} : vector<1x4xf32>, vector<4x256xf32>, vector<1x256xf32> -> vector<1x256xf32>
    %389 = vector.extract_strided_slice %388 {offsets = [0, 0], sizes = [1, 128], strides = [1, 1]} : vector<1x256xf32> to vector<1x128xf32>
    %cst_111 = arith.constant 2.500000e-01 : f32
    %390 = vector.broadcast %cst_111 : f32 to vector<1x128xf32>
    %391 = arith.mulf %389, %390 : vector<1x128xf32>
    %392 = vector.extract_strided_slice %388 {offsets = [0, 128], sizes = [1, 128], strides = [1, 1]} : vector<1x256xf32> to vector<1x128xf32>
    %cst_112 = arith.constant 2.500000e-01 : f32
    %393 = vector.broadcast %cst_112 : f32 to vector<1x128xf32>
    %394 = arith.mulf %392, %393 : vector<1x128xf32>
    %395 = arith.mulf %391, %391 : vector<1x128xf32>
    %396 = arith.subf %394, %395 : vector<1x128xf32>
    %cst_113 = arith.constant 0.000000e+00 : f32
    %397 = vector.broadcast %cst_113 : f32 to vector<1x128xf32>
    %398 = arith.maximumf %396, %397 : vector<1x128xf32>
    %cst_114 = arith.constant 9.99999974E-6 : f32
    %399 = vector.broadcast %cst_114 : f32 to vector<1x128xf32>
    %400 = arith.addf %398, %399 : vector<1x128xf32>
    %401 = math.rsqrt %400 : vector<1x128xf32>
    %402 = arith.mulf %383, %401 : vector<1x128xf32>
    %403 = arith.mulf %391, %402 : vector<1x128xf32>
    %404 = arith.subf %384, %403 : vector<1x128xf32>
    %405 = vector.broadcast %402 : vector<1x128xf32> to vector<4x128xf32>
    %406 = arith.mulf %382, %405 : vector<4x128xf32>
    %407 = vector.broadcast %404 : vector<1x128xf32> to vector<4x128xf32>
    %408 = arith.addf %406, %407 : vector<4x128xf32>
    %409 = vector.extract_strided_slice %408 {offsets = [0, 0], sizes = [4, 32], strides = [1, 1]} : vector<4x128xf32> to vector<4x32xf32>
    %410 = arith.truncf %409 : vector<4x32xf32> to vector<4x32xbf16>
    %411 = arith.truncf %281 : vector<32x128xf32> to vector<32x128xbf16>
    %cst_115 = arith.constant dense<0.000000e+00> : vector<4x128xf32>
    %412 = tpu.matmul %410, %411, %cst_115 {dimension_numbers = #tpu.dot_dimension_numbers<[1], [0], [0], [1], [0, 0, 1, 1], [], []>} : vector<4x32xbf16>, vector<32x128xbf16>, vector<4x128xf32> -> vector<4x128xf32>
    %413 = vector.extract_strided_slice %283 {offsets = [3, 0], sizes = [1, 128], strides = [1, 1]} : vector<8x128xf32> to vector<1x128xf32>
    %414 = vector.broadcast %413 : vector<1x128xf32> to vector<4x128xf32>
    %415 = arith.addf %412, %414 : vector<4x128xf32>
    %c40_116 = arith.constant 40 : index
    %c0_117 = arith.constant 0 : index
    %416 = vector.load %arg4[%c40_116, %c0_117] : memref<48x128xf32, #tpu.memory_space<vmem>>, vector<4x128xf32>
    tpu.vector_store %arg4[%c40_116, %c0_117], %415 {strides = array<i32>} : memref<48x128xf32, #tpu.memory_space<vmem>>, vector<4x128xf32>,
    return
  }
}

</mosaic_0001>

<llo_original>
// kernel: fwd.1
$region0: #{fwd.1}
  #allocation0 [shape = 'u32[]', space=smem, size = 0x4, offset = 0x4, fixed_abs, tag = 'smem constant byte address 0x4 - core index']
  #allocation1 [shape = 'u32[144,128]{1,0:T(1,128)}', space=vmem, size = 0x12000, scoped, tag = 'internal scratch']
  %s0 = inlined_call_operand.vmem [shape: f32[16,6], index: 0, kind: input, shape index: {}]
  %s1 = inlined_call_operand.vmem [shape: f32[24,4], index: 1, kind: input, shape index: {}]
  %s2 = inlined_call_operand.vmem [shape: f32[4,3], index: 2, kind: input, shape index: {}]
  %s3 = inlined_call_operand.hbm [shape: f32[360,128], index: 3, kind: input, shape index: {}]
  %s4 = inlined_call_operand.vmem [shape: f32[48,128], index: 4, kind: output, shape index: {}]
  %s5 = sld [smem:[#allocation0]]
  $region30: #{fwd.1} parent=0
    _
  %s7 = ssub.s32 1, %s5
  %s8 = scalar_select 0, %s7, %s5
  $region1: #{fwd.1} parent=0
    #allocation2 [shape = 'u8[184320]{0}', space=vmem, size = 0x2d000, scoped, tag = 'input window, operand 3, single buffered']
    #allocation3 [shape = 's32[1]{0}', space=sflag, size = 0x4, scoped, tag = 'scoped memory for fwd.1']
    %9 = vsyncpa [#allocation3], 0
    // Predicated region
    $region2: #{fwd.1} parent=1 // pred_check
      _
    $region3: #{fwd.1} parent=1 // pred_check_branch
      %11 = sbr.rel (0) target = $region5
    $region4: #{fwd.1} parent=1 // pred_region
      _
    $region5: #{fwd.1} parent=1 // pred_fallthru
      _
    // Predicated region
    $region6: #{fwd.1} parent=1 // pred_check
      _
    $region7: #{fwd.1} parent=1 // pred_check_branch
      %13 = sbr.rel (0) target = $region9
    $region8: #{fwd.1} parent=1 // pred_region
      _
    $region9: #{fwd.1} parent=1 // pred_fallthru
      _
    // Predicated region
    $region10: #{fwd.1} parent=1 // pred_check
      _
    $region11: #{fwd.1} parent=1 // pred_check_branch
      %15 = sbr.rel (0) target = $region13
    $region12: #{fwd.1} parent=1 // pred_region
      _
    $region13: #{fwd.1} parent=1 // pred_fallthru
      _
    // Predicated region
    $region14: #{fwd.1} parent=1 // pred_check
      _
    $region15: #{fwd.1} parent=1 // pred_check_branch
      %17 = sbr.rel (0) target = $region17
    $region16: #{fwd.1} parent=1 // pred_region
      %s19 = ssub.s32 5760, 5760
      %20 = vsyncadd [#allocation3], %s19
      %s21 = sshll.u32 [#allocation2], 4
      %s22 = int_to_ptr.vmem [resolvable:$true] %s21
      %27 = dma.hbm_to_vmem [thread:$0]  %s3, 5760, %s22, [#allocation3], 128, 128, 8
    $region17: #{fwd.1} parent=1 // pred_fallthru
      _
    // Predicated region
    $region18: #{fwd.1} parent=1 // pred_check
      _
    $region19: #{fwd.1} parent=1 // pred_check_branch
      %29 = sbr.rel (0) target = $region21
    $region20: #{fwd.1} parent=1 // pred_region
      %30 = dma.done [#allocation3], 5760
    $region21: #{fwd.1} parent=1 // pred_fallthru
      _
    %v32 = vld [vmem:[#allocation2] sm:$0x3f]
    %v33 = vld [vmem:[#allocation2 + $0x8] sm:$0xff]
    %v34 = vld [vmem:[#allocation2 + $0x10] sm:$0xff]
    %v35 = vld [vmem:[#allocation2 + $0x18] sm:$0xff]
    %v36 = vld [vmem:[#allocation2 + $0x20] sm:$0xff]
    %v37 = vld [vmem:[#allocation2 + $0x28] sm:$0xff]
    %v38 = vld [vmem:[#allocation2 + $0x30] sm:$0xff]
    %v39 = vld [vmem:[#allocation2 + $0x38] sm:$0xff]
    %v40 = vld [vmem:[#allocation2 + $0x40] sm:$0xff]
    %v41 = vld [vmem:[#allocation2 + $0x48] sm:$0xff]
    %v42 = vld [vmem:[#allocation2 + $0x50] sm:$0xff]
    %v43 = vld [vmem:[#allocation2 + $0x58] sm:$0xff]
    %v44 = vld [vmem:[#allocation2 + $0x60] sm:$0xff]
    %v45 = vld [vmem:[#allocation2 + $0x68] sm:$0xff]
    %v46 = vld [vmem:[#allocation2 + $0x70] sm:$0xff]
    %v47 = vld [vmem:[%s0] sm:$0xff]
    %v48 = vld [vmem:[%s0 + $0x8] sm:$0xff]
    %v49 = vpack.c.bf16 %v48, %v47
    %v50 = vpack.c.bf16 %v32, %v32
    %v51 = vlaneseq
    %v52 = vshrl.u32 %v51, 7
    %v53 = vsub.s32 0, %v52
    %v54 = vrot.slane %v45, %v53
    %vm55 = vcmask 48128
    %v57 = vsel %vm55, %v49, 0
    %vm59 = vcmask 1042432
    %v61 = vsel %vm59, %v50, 0
    %63 = vmatprep.subr.bf16.mxu0 0
    %64 = vmatpush1.bf16.msra.mxu0 %v61
    %65 = vmatprep.subr.bf16.mxu0 0
    %66 = vmatpush1.bf16.msra.mxu0 0
    %67 = vmatprep.subr.bf16.mxu0 0
    %68 = vmatpush1.bf16.msra.mxu0 0
    %69 = vmatprep.subr.bf16.mxu0 0
    %70 = vmatpush1.bf16.msra.mxu0 0
    %71 = vmatprep.subr.bf16.mxu0 0
    %72 = vmatpush1.bf16.msra.mxu0 0
    %73 = vmatprep.subr.bf16.mxu0 0
    %74 = vmatpush1.bf16.msra.mxu0 0
    %75 = vmatprep.subr.bf16.mxu0 0
    %76 = vmatpush1.bf16.msra.mxu0 0
    %77 = vmatprep.subr.bf16.mxu0 0
    %78 = vmatpush1.bf16.msra.mxu0 0
    %79 = vmatprep.subr.bf16.mxu0 0
    %80 = vmatpush1.bf16.msra.mxu0 0
    %81 = vmatprep.subr.bf16.mxu0 0
    %82 = vmatpush1.bf16.msra.mxu0 0
    %83 = vmatprep.subr.bf16.mxu0 0
    %84 = vmatpush1.bf16.msra.mxu0 0
    %85 = vmatprep.subr.bf16.mxu0 0
    %86 = vmatpush1.bf16.msra.mxu0 0
    %87 = vmatprep.subr.bf16.mxu0 0
    %88 = vmatpush1.bf16.msra.mxu0 0
    %89 = vmatprep.subr.bf16.mxu0 0
    %90 = vmatpush1.bf16.msra.mxu0 0
    %91 = vmatprep.subr.bf16.mxu0 0
    %92 = vmatpush1.bf16.msra.mxu0 0
    %93 = vmatprep.subr.bf16.mxu0 0
    %94 = vmatpush1.bf16.msra.mxu0 0
    %95 = vmatprep.mubr.bf16.mxu0 0
    %96 = vmatmul.mubr.bf16.gmra.mrb[0].mxu0 %v57
    %v97 = vpop.f32.mrb[0].mxu0
    %v98 = vadd.f32 %v54, %v97
    %v99 = vpop.f32.mrb[0].mxu0
    %v100 = vpop.f32.mrb[0].mxu0
    %v101 = vadd.f32 %v54, %v100
    %v102 = vpop.f32.mrb[0].mxu0
    %103 = vdwg.mxu0
    %v104 = vmul.f32 %v98, 0.5
    %v105 = vmul.f32 %v101, 0.5
    %v106 = vmul.f32 %v98, 0.044715
    %v107 = vmul.f32 %v101, 0.044715
    %v108 = vmul.f32 %v106, %v98
    %v109 = vmul.f32 %v107, %v101
    %v110 = vmul.f32 %v108, %v98
    %v111 = vmul.f32 %v109, %v101
    %v112 = vadd.f32 %v98, %v110
    %v113 = vadd.f32 %v101, %v111
    %v114 = vmul.f32 %v112, 0.7978846
    %v115 = vmul.f32 %v113, 0.7978846
    %v116 = vtanh.pop %v114
    %v117 = vtanh.pop %v115
    %v118 = vadd.f32 %v116, 1.0
    %v119 = vadd.f32 %v117, 1.0
    %v120 = vmul.f32 %v104, %v118
    %v121 = vmul.f32 %v105, %v119
    %v122 = vmul.f32 %v120, %v120
    %v123 = vmul.f32 %v121, %v121
    %vm124 = vcmask 130048
    %v126 = vsel %vm124, 1.0, 0
    %128 = vmatprep.subr.mxu0 %v122
    %129 = vmatpush1.msra.mxu0 %v120
    %130 = vmatprep.subr.mxu0 %v123
    %131 = vmatpush1.msra.mxu0 %v121
    %132 = vmatprep.subr.mxu0 0.0
    %133 = vmatpush1.msra.mxu0 0.0
    %134 = vmatprep.subr.mxu0 0.0
    %135 = vmatpush1.msra.mxu0 0.0
    %136 = vmatprep.subr.mxu0 0.0
    %137 = vmatpush1.msra.mxu0 0.0
    %138 = vmatprep.subr.mxu0 0.0
    %139 = vmatpush1.msra.mxu0 0.0
    %140 = vmatprep.subr.mxu0 0.0
    %141 = vmatpush1.msra.mxu0 0.0
    %142 = vmatprep.subr.mxu0 0.0
    %143 = vmatpush1.msra.mxu0 0.0
    %144 = vmatprep.subr.mxu0 0.0
    %145 = vmatpush1.msra.mxu0 0.0
    %146 = vmatprep.subr.mxu0 0.0
    %147 = vmatpush1.msra.mxu0 0.0
    %148 = vmatprep.subr.mxu0 0.0
    %149 = vmatpush1.msra.mxu0 0.0
    %150 = vmatprep.subr.mxu0 0.0
    %151 = vmatpush1.msra.mxu0 0.0
    %152 = vmatprep.subr.mxu0 0.0
    %153 = vmatpush1.msra.mxu0 0.0
    %154 = vmatprep.subr.mxu0 0.0
    %155 = vmatpush1.msra.mxu0 0.0
    %156 = vmatprep.subr.mxu0 0.0
    %157 = vmatpush1.msra.mxu0 0.0
    %158 = vmatprep.subr.mxu0 0.0
    %159 = vmatpush1.msra.mxu0 0.0
    %160 = vmatprep.subr.mxu0 0.0
    %161 = vmatpush1.msra.mxu0 0.0
    %162 = vmatprep.subr.mxu0 0.0
    %163 = vmatpush1.msra.mxu0 0.0
    %164 = vmatprep.subr.mxu0 0.0
    %165 = vmatpush1.msra.mxu0 0.0
    %166 = vmatprep.subr.mxu0 0.0
    %167 = vmatpush1.msra.mxu0 0.0
    %168 = vmatprep.subr.mxu0 0.0
    %169 = vmatpush1.msra.mxu0 0.0
    %170 = vmatprep.subr.mxu0 0.0
    %171 = vmatpush1.msra.mxu0 0.0
    %172 = vmatprep.subr.mxu0 0.0
    %173 = vmatpush1.msra.mxu0 0.0
    %174 = vmatprep.subr.mxu0 0.0
    %175 = vmatpush1.msra.mxu0 0.0
    %176 = vmatprep.subr.mxu0 0.0
    %177 = vmatpush1.msra.mxu0 0.0
    %178 = vmatprep.subr.mxu0 0.0
    %179 = vmatpush1.msra.mxu0 0.0
    %180 = vmatprep.subr.mxu0 0.0
    %181 = vmatpush1.msra.mxu0 0.0
    %182 = vmatprep.subr.mxu0 0.0
    %183 = vmatpush1.msra.mxu0 0.0
    %184 = vmatprep.subr.mxu0 0.0
    %185 = vmatpush1.msra.mxu0 0.0
    %186 = vmatprep.subr.mxu0 0.0
    %187 = vmatpush1.msra.mxu0 0.0
    %188 = vmatprep.subr.mxu0 0.0
    %189 = vmatpush1.msra.mxu0 0.0
    %190 = vmatprep.subr.mxu0 0.0
    %191 = vmatpush1.msra.mxu0 0.0
    %192 = vmatprep.mubr.f32.mxu0 0.0
    %193 = vmatmul.mubr.f32.gmra.mrb[0].mxu0 %v126
    %v194 = vpop.f32.mrb[0].mxu0
    %v195 = vadd.f32 0.0, %v194
    %v196 = vpop.f32.mrb[0].mxu0
    %v197 = vadd.f32 0.0, %v196
    %198 = vdwg.mxu0
    %v199 = vmul.f32 %v195, 0.0625
    %v200 = vmul.f32 %v197, 0.0625
    %v201 = vmul.f32 %v199, %v199
    %v202 = vsub.f32 %v200, %v201
    %v203 = vmax.f32 %v202, 0.0
    %v204 = vadd.f32 %v203, 1e-05
    %v205 = vrsqrt.pop %v204
    %v207 = vrot.slane %v205, 7
    %v209 = vmul.f32 %v45, %v207
    %v211 = vrot.slane %v209, 1
    %v213 = vmul.f32 %v199, %v211
    %v215 = vrot.slane %v213, 6
    %v217 = vsub.f32 %v45, %v215
    %v218 = vlaneseq
    %v219 = vshrl.u32 %v218, 7
    %v220 = vsub.s32 1, %v219
    %v221 = vrot.slane %v209, %v220
    %v222 = vmul.f32 %v120, %v221
    %v223 = vmul.f32 %v121, %v221
    %v224 = vlaneseq
    %v225 = vshrl.u32 %v224, 7
    %v226 = vsub.s32 2, %v225
    %v227 = vrot.slane %v217, %v226
    %v228 = vadd.f32 %v222, %v227
    %v229 = vadd.f32 %v223, %v227
    %v230 = vpack.c.bf16 %v229, %v228
    %v231 = vpack.c.bf16 %v34, %v33
    %v232 = vpack.c.bf16 %v36, %v35
    %v233 = vlaneseq
    %v234 = vshrl.u32 %v233, 7
    %v235 = vsub.s32 3, %v234
    %v236 = vrot.slane %v45, %v235
    %vm237 = vcmask 261120
    %v239 = vsel %vm237, %v230, 0
    %241 = vmatprep.subr.bf16.mxu0 0
    %242 = vmatpush1.bf16.msra.mxu0 %v231
    %243 = vmatprep.subr.bf16.mxu0 0
    %244 = vmatpush1.bf16.msra.mxu0 %v232
    %245 = vmatprep.subr.bf16.mxu0 0
    %246 = vmatpush1.bf16.msra.mxu0 0
    %247 = vmatprep.subr.bf16.mxu0 0
    %248 = vmatpush1.bf16.msra.mxu0 0
    %249 = vmatprep.subr.bf16.mxu0 0
    %250 = vmatpush1.bf16.msra.mxu0 0
    %251 = vmatprep.subr.bf16.mxu0 0
    %252 = vmatpush1.bf16.msra.mxu0 0
    %253 = vmatprep.subr.bf16.mxu0 0
    %254 = vmatpush1.bf16.msra.mxu0 0
    %255 = vmatprep.subr.bf16.mxu0 0
    %256 = vmatpush1.bf16.msra.mxu0 0
    %257 = vmatprep.subr.bf16.mxu0 0
    %258 = vmatpush1.bf16.msra.mxu0 0
    %259 = vmatprep.subr.bf16.mxu0 0
    %260 = vmatpush1.bf16.msra.mxu0 0
    %261 = vmatprep.subr.bf16.mxu0 0
    %262 = vmatpush1.bf16.msra.mxu0 0
    %263 = vmatprep.subr.bf16.mxu0 0
    %264 = vmatpush1.bf16.msra.mxu0 0
    %265 = vmatprep.subr.bf16.mxu0 0
    %266 = vmatpush1.bf16.msra.mxu0 0
    %267 = vmatprep.subr.bf16.mxu0 0
    %268 = vmatpush1.bf16.msra.mxu0 0
    %269 = vmatprep.subr.bf16.mxu0 0
    %270 = vmatpush1.bf16.msra.mxu0 0
    %271 = vmatprep.subr.bf16.mxu0 0
    %272 = vmatpush1.bf16.msra.mxu0 0
    %273 = vmatprep.mubr.bf16.mxu0 0
    %274 = vmatmul.mubr.bf16.gmra.mrb[0].mxu0 %v239
    %v275 = vpop.f32.mrb[0].mxu0
    %v276 = vadd.f32 %v236, %v275
    %v277 = vpop.f32.mrb[0].mxu0
    %v278 = vpop.f32.mrb[0].mxu0
    %v279 = vadd.f32 %v236, %v278
    %v280 = vpop.f32.mrb[0].mxu0
    %281 = vdwg.mxu0
    %282 = vadd.xlane.f32.xlu0 %v276
    %v283 = vpop.xlane.xlu0 %282
    %284 = vadd.xlane.f32.xlu0 %v279
    %v285 = vpop.xlane.xlu0 %284
    %v286 = vmul.f32 %v283, 0.03125
    %v287 = vmul.f32 %v285, 0.03125
    %v288 = vmul.f32 %v276, %v276
    %v289 = vmul.f32 %v279, %v279
    %290 = vadd.xlane.f32.xlu0 %v288
    %v291 = vpop.xlane.xlu0 %290
    %292 = vadd.xlane.f32.xlu0 %v289
    %v293 = vpop.xlane.xlu0 %292
    %v294 = vmul.f32 %v291, 0.03125
    %v295 = vmul.f32 %v293, 0.03125
    %v296 = vmul.f32 %v286, %v286
    %v297 = vmul.f32 %v287, %v287
    %v298 = vsub.f32 %v294, %v296
    %v299 = vsub.f32 %v295, %v297
    %v300 = vmax.f32 %v298, 0.0
    %v301 = vmax.f32 %v299, 0.0
    %v302 = vsub.f32 %v276, %v286
    %v303 = vsub.f32 %v279, %v287
    %v304 = vadd.f32 %v300, 1e-05
    %v305 = vadd.f32 %v301, 1e-05
    %v306 = vrsqrt.pop %v304
    %v307 = vrsqrt.pop %v305
    %v308 = vmul.f32 %v302, %v306
    %v309 = vmul.f32 %v303, %v307
    %v310 = vlaneseq
    %v311 = vshrl.u32 %v310, 7
    %v312 = vsub.s32 4, %v311
    %v313 = vrot.slane %v45, %v312
    %v314 = vmul.f32 %v308, %v313
    %v315 = vmul.f32 %v309, %v313
    %v316 = vlaneseq
    %v317 = vshrl.u32 %v316, 7
    %v318 = vsub.s32 5, %v317
    %v319 = vrot.slane %v45, %v318
    %v320 = vadd.f32 %v314, %v319
    %v321 = vadd.f32 %v315, %v319
    %v322 = vpack.c.bf16 %v321, %v320
    %v323 = vpack.c.bf16 %v38, %v37
    %v324 = vpack.c.bf16 %v40, %v39
    %v325 = vlaneseq
    %v326 = vshrl.u32 %v325, 7
    %v327 = vsub.s32 0, %v326
    %v328 = vrot.slane %v46, %v327
    %v330 = vsel %vm237, %v322, 0
    %332 = vmatprep.subr.bf16.mxu0 0
    %333 = vmatpush1.bf16.msra.mxu0 %v323
    %334 = vmatprep.subr.bf16.mxu0 0
    %335 = vmatpush1.bf16.msra.mxu0 %v324
    %336 = vmatprep.subr.bf16.mxu0 0
    %337 = vmatpush1.bf16.msra.mxu0 0
    %338 = vmatprep.subr.bf16.mxu0 0
    %339 = vmatpush1.bf16.msra.mxu0 0
    %340 = vmatprep.subr.bf16.mxu0 0
    %341 = vmatpush1.bf16.msra.mxu0 0
    %342 = vmatprep.subr.bf16.mxu0 0
    %343 = vmatpush1.bf16.msra.mxu0 0
    %344 = vmatprep.subr.bf16.mxu0 0
    %345 = vmatpush1.bf16.msra.mxu0 0
    %346 = vmatprep.subr.bf16.mxu0 0
    %347 = vmatpush1.bf16.msra.mxu0 0
    %348 = vmatprep.subr.bf16.mxu0 0
    %349 = vmatpush1.bf16.msra.mxu0 0
    %350 = vmatprep.subr.bf16.mxu0 0
    %351 = vmatpush1.bf16.msra.mxu0 0
    %352 = vmatprep.subr.bf16.mxu0 0
    %353 = vmatpush1.bf16.msra.mxu0 0
    %354 = vmatprep.subr.bf16.mxu0 0
    %355 = vmatpush1.bf16.msra.mxu0 0
    %356 = vmatprep.subr.bf16.mxu0 0
    %357 = vmatpush1.bf16.msra.mxu0 0
    %358 = vmatprep.subr.bf16.mxu0 0
    %359 = vmatpush1.bf16.msra.mxu0 0
    %360 = vmatprep.subr.bf16.mxu0 0
    %361 = vmatpush1.bf16.msra.mxu0 0
    %362 = vmatprep.subr.bf16.mxu0 0
    %363 = vmatpush1.bf16.msra.mxu0 0
    %364 = vmatprep.mubr.bf16.mxu0 0
    %365 = vmatmul.mubr.bf16.gmra.mrb[0].mxu0 %v330
    %v366 = vpop.f32.mrb[0].mxu0
    %v367 = vadd.f32 %v328, %v366
    %v368 = vpop.f32.mrb[0].mxu0
    %v369 = vpop.f32.mrb[0].mxu0
    %v370 = vadd.f32 %v328, %v369
    %v371 = vpop.f32.mrb[0].mxu0
    %372 = vdwg.mxu0
    %v373 = vmul.f32 %v367, 0.5
    %v374 = vmul.f32 %v370, 0.5
    %v375 = vmul.f32 %v367, 0.044715
    %v376 = vmul.f32 %v370, 0.044715
    %v377 = vmul.f32 %v375, %v367
    %v378 = vmul.f32 %v376, %v370
    %v379 = vmul.f32 %v377, %v367
    %v380 = vmul.f32 %v378, %v370
    %v381 = vadd.f32 %v367, %v379
    %v382 = vadd.f32 %v370, %v380
    %v383 = vmul.f32 %v381, 0.7978846
    %v384 = vmul.f32 %v382, 0.7978846
    %v385 = vtanh.pop %v383
    %v386 = vtanh.pop %v384
    %v387 = vadd.f32 %v385, 1.0
    %v388 = vadd.f32 %v386, 1.0
    %v389 = vmul.f32 %v373, %v387
    %v390 = vmul.f32 %v374, %v388
    %v391 = vmul.f32 %v389, %v389
    %v392 = vmul.f32 %v390, %v390
    %393 = vmatprep.subr.mxu0 %v391
    %394 = vmatpush1.msra.mxu0 %v389
    %395 = vmatprep.subr.mxu0 %v392
    %396 = vmatpush1.msra.mxu0 %v390
    %397 = vmatprep.subr.mxu0 0.0
    %398 = vmatpush1.msra.mxu0 0.0
    %399 = vmatprep.subr.mxu0 0.0
    %400 = vmatpush1.msra.mxu0 0.0
    %401 = vmatprep.subr.mxu0 0.0
    %402 = vmatpush1.msra.mxu0 0.0
    %403 = vmatprep.subr.mxu0 0.0
    %404 = vmatpush1.msra.mxu0 0.0
    %405 = vmatprep.subr.mxu0 0.0
    %406 = vmatpush1.msra.mxu0 0.0
    %407 = vmatprep.subr.mxu0 0.0
    %408 = vmatpush1.msra.mxu0 0.0
    %409 = vmatprep.subr.mxu0 0.0
    %410 = vmatpush1.msra.mxu0 0.0
    %411 = vmatprep.subr.mxu0 0.0
    %412 = vmatpush1.msra.mxu0 0.0
    %413 = vmatprep.subr.mxu0 0.0
    %414 = vmatpush1.msra.mxu0 0.0
    %415 = vmatprep.subr.mxu0 0.0
    %416 = vmatpush1.msra.mxu0 0.0
    %417 = vmatprep.subr.mxu0 0.0
    %418 = vmatpush1.msra.mxu0 0.0
    %419 = vmatprep.subr.mxu0 0.0
    %420 = vmatpush1.msra.mxu0 0.0
    %421 = vmatprep.subr.mxu0 0.0
    %422 = vmatpush1.msra.mxu0 0.0
    %423 = vmatprep.subr.mxu0 0.0
    %424 = vmatpush1.msra.mxu0 0.0
    %425 = vmatprep.subr.mxu0 0.0
    %426 = vmatpush1.msra.mxu0 0.0
    %427 = vmatprep.subr.mxu0 0.0
    %428 = vmatpush1.msra.mxu0 0.0
    %429 = vmatprep.subr.mxu0 0.0
    %430 = vmatpush1.msra.mxu0 0.0
    %431 = vmatprep.subr.mxu0 0.0
    %432 = vmatpush1.msra.mxu0 0.0
    %433 = vmatprep.subr.mxu0 0.0
    %434 = vmatpush1.msra.mxu0 0.0
    %435 = vmatprep.subr.mxu0 0.0
    %436 = vmatpush1.msra.mxu0 0.0
    %437 = vmatprep.subr.mxu0 0.0
    %438 = vmatpush1.msra.mxu0 0.0
    %439 = vmatprep.subr.mxu0 0.0
    %440 = vmatpush1.msra.mxu0 0.0
    %441 = vmatprep.subr.mxu0 0.0
    %442 = vmatpush1.msra.mxu0 0.0
    %443 = vmatprep.subr.mxu0 0.0
    %444 = vmatpush1.msra.mxu0 0.0
    %445 = vmatprep.subr.mxu0 0.0
    %446 = vmatpush1.msra.mxu0 0.0
    %447 = vmatprep.subr.mxu0 0.0
    %448 = vmatpush1.msra.mxu0 0.0
    %449 = vmatprep.subr.mxu0 0.0
    %450 = vmatpush1.msra.mxu0 0.0
    %451 = vmatprep.subr.mxu0 0.0
    %452 = vmatpush1.msra.mxu0 0.0
    %453 = vmatprep.subr.mxu0 0.0
    %454 = vmatpush1.msra.mxu0 0.0
    %455 = vmatprep.subr.mxu0 0.0
    %456 = vmatpush1.msra.mxu0 0.0
    %457 = vmatprep.mubr.f32.mxu0 0.0
    %458 = vmatmul.mubr.f32.gmra.mrb[0].mxu0 %v126
    %v459 = vpop.f32.mrb[0].mxu0
    %v460 = vadd.f32 0.0, %v459
    %v461 = vpop.f32.mrb[0].mxu0
    %v462 = vadd.f32 0.0, %v461
    %463 = vdwg.mxu0
    %v464 = vmul.f32 %v460, 0.0625
    %v465 = vmul.f32 %v462, 0.0625
    %v466 = vmul.f32 %v464, %v464
    %v467 = vsub.f32 %v465, %v466
    %v468 = vmax.f32 %v467, 0.0
    %v469 = vadd.f32 %v468, 1e-05
    %v470 = vrsqrt.pop %v469
    %v472 = vrot.slane %v470, 7
    %v474 = vmul.f32 %v46, %v472
    %v476 = vrot.slane %v474, 1
    %v478 = vmul.f32 %v464, %v476
    %v480 = vrot.slane %v478, 6
    %v482 = vsub.f32 %v46, %v480
    %v483 = vlaneseq
    %v484 = vshrl.u32 %v483, 7
    %v485 = vsub.s32 1, %v484
    %v486 = vrot.slane %v474, %v485
    %v487 = vmul.f32 %v389, %v486
    %v488 = vmul.f32 %v390, %v486
    %v489 = vlaneseq
    %v490 = vshrl.u32 %v489, 7
    %v491 = vsub.s32 2, %v490
    %v492 = vrot.slane %v482, %v491
    %v493 = vadd.f32 %v487, %v492
    %v494 = vadd.f32 %v488, %v492
    %v495 = vpack.c.bf16 %v494, %v493
    %v496 = vpack.c.bf16 %v42, %v41
    %v497 = vpack.c.bf16 %v44, %v43
    %v498 = vlaneseq
    %v499 = vshrl.u32 %v498, 7
    %v500 = vsub.s32 3, %v499
    %v501 = vrot.slane %v46, %v500
    %v503 = vsel %vm237, %v495, 0
    %505 = vmatprep.subr.bf16.mxu0 0
    %506 = vmatpush1.bf16.msra.mxu0 %v496
    %507 = vmatprep.subr.bf16.mxu0 0
    %508 = vmatpush1.bf16.msra.mxu0 %v497
    %509 = vmatprep.subr.bf16.mxu0 0
    %510 = vmatpush1.bf16.msra.mxu0 0
    %511 = vmatprep.subr.bf16.mxu0 0
    %512 = vmatpush1.bf16.msra.mxu0 0
    %513 = vmatprep.subr.bf16.mxu0 0
    %514 = vmatpush1.bf16.msra.mxu0 0
    %515 = vmatprep.subr.bf16.mxu0 0
    %516 = vmatpush1.bf16.msra.mxu0 0
    %517 = vmatprep.subr.bf16.mxu0 0
    %518 = vmatpush1.bf16.msra.mxu0 0
    %519 = vmatprep.subr.bf16.mxu0 0
    %520 = vmatpush1.bf16.msra.mxu0 0
    %521 = vmatprep.subr.bf16.mxu0 0
    %522 = vmatpush1.bf16.msra.mxu0 0
    %523 = vmatprep.subr.bf16.mxu0 0
    %524 = vmatpush1.bf16.msra.mxu0 0
    %525 = vmatprep.subr.bf16.mxu0 0
    %526 = vmatpush1.bf16.msra.mxu0 0
    %527 = vmatprep.subr.bf16.mxu0 0
    %528 = vmatpush1.bf16.msra.mxu0 0
    %529 = vmatprep.subr.bf16.mxu0 0
    %530 = vmatpush1.bf16.msra.mxu0 0
    %531 = vmatprep.subr.bf16.mxu0 0
    %532 = vmatpush1.bf16.msra.mxu0 0
    %533 = vmatprep.subr.bf16.mxu0 0
    %534 = vmatpush1.bf16.msra.mxu0 0
    %535 = vmatprep.subr.bf16.mxu0 0
    %536 = vmatpush1.bf16.msra.mxu0 0
    %537 = vmatprep.mubr.bf16.mxu0 0
    %538 = vmatmul.mubr.bf16.gmra.mrb[0].mxu0 %v503
    %v539 = vpop.f32.mrb[0].mxu0
    %v540 = vadd.f32 %v501, %v539
    %v541 = vpop.f32.mrb[0].mxu0
    %v542 = vpop.f32.mrb[0].mxu0
    %v543 = vadd.f32 %v501, %v542
    %v544 = vpop.f32.mrb[0].mxu0
    %545 = vdwg.mxu0
    %546 = vst [vmem:[%s4] sm:$0xff] %v540
    %547 = vst [vmem:[%s4 + $0x8] sm:$0xff] %v543
    %v548 = vld [vmem:[#allocation2 + $0x78] sm:$0xf]
    %v549 = vld [vmem:[#allocation2 + $0x80] sm:$0xff]
    %v550 = vld [vmem:[#allocation2 + $0x88] sm:$0xff]
    %v551 = vld [vmem:[#allocation2 + $0x90] sm:$0xff]
    %v552 = vld [vmem:[#allocation2 + $0x98] sm:$0xff]
    %v553 = vld [vmem:[#allocation2 + $0xa0] sm:$0xff]
    %v554 = vld [vmem:[#allocation2 + $0xa8] sm:$0xff]
    %v555 = vld [vmem:[#allocation2 + $0xb0] sm:$0xff]
    %v556 = vld [vmem:[#allocation2 + $0xb8] sm:$0xff]
    %v557 = vld [vmem:[#allocation2 + $0xc0] sm:$0xff]
    %v558 = vld [vmem:[#allocation2 + $0xc8] sm:$0xff]
    %v559 = vld [vmem:[#allocation2 + $0xd0] sm:$0xff]
    %v560 = vld [vmem:[#allocation2 + $0xd8] sm:$0xff]
    %v561 = vld [vmem:[#allocation2 + $0xe0] sm:$0xff]
    %v562 = vld [vmem:[#allocation2 + $0xe8] sm:$0xff]
    %v563 = vld [vmem:[%s1] sm:$0xff]
    %v564 = vld [vmem:[%s1 + $0x8] sm:$0xff]
    %v565 = vld [vmem:[%s1 + $0x10] sm:$0xff]
    %v566 = vpack.c.bf16 %v564, %v563
    %v567 = vpack.c.bf16 %v565, %v565
    %v568 = vpack.c.bf16 %v548, %v548
    %v569 = vlaneseq
    %v570 = vshrl.u32 %v569, 7
    %v571 = vsub.s32 0, %v570
    %v572 = vrot.slane %v561, %v571
    %vm573 = vcmask 31744
    %v575 = vsel %vm573, %v566, 0
    %v578 = vsel %vm573, %v567, 0
    %vm580 = vcmask 1041408
    %v582 = vsel %vm580, %v568, 0
    %584 = vmatprep.subr.bf16.mxu0 0
    %585 = vmatpush1.bf16.msra.mxu0 %v582
    %586 = vmatprep.subr.bf16.mxu0 0
    %587 = vmatpush1.bf16.msra.mxu0 0
    %588 = vmatprep.subr.bf16.mxu0 0
    %589 = vmatpush1.bf16.msra.mxu0 0
    %590 = vmatprep.subr.bf16.mxu0 0
    %591 = vmatpush1.bf16.msra.mxu0 0
    %592 = vmatprep.subr.bf16.mxu0 0
    %593 = vmatpush1.bf16.msra.mxu0 0
    %594 = vmatprep.subr.bf16.mxu0 0
    %595 = vmatpush1.bf16.msra.mxu0 0
    %596 = vmatprep.subr.bf16.mxu0 0
    %597 = vmatpush1.bf16.msra.mxu0 0
    %598 = vmatprep.subr.bf16.mxu0 0
    %599 = vmatpush1.bf16.msra.mxu0 0
    %600 = vmatprep.subr.bf16.mxu0 0
    %601 = vmatpush1.bf16.msra.mxu0 0
    %602 = vmatprep.subr.bf16.mxu0 0
    %603 = vmatpush1.bf16.msra.mxu0 0
    %604 = vmatprep.subr.bf16.mxu0 0
    %605 = vmatpush1.bf16.msra.mxu0 0
    %606 = vmatprep.subr.bf16.mxu0 0
    %607 = vmatpush1.bf16.msra.mxu0 0
    %608 = vmatprep.subr.bf16.mxu0 0
    %609 = vmatpush1.bf16.msra.mxu0 0
    %610 = vmatprep.subr.bf16.mxu0 0
    %611 = vmatpush1.bf16.msra.mxu0 0
    %612 = vmatprep.subr.bf16.mxu0 0
    %613 = vmatpush1.bf16.msra.mxu0 0
    %614 = vmatprep.subr.bf16.mxu0 0
    %615 = vmatpush1.bf16.msra.mxu0 0
    %616 = vmatprep.mubr.bf16.mxu0 0
    %617 = vmatmul.mubr.bf16.gmra.mrb[0].mxu0 %v575
    %v618 = vpop.f32.mrb[0].mxu0
    %v619 = vadd.f32 %v572, %v618
    %v620 = vpop.f32.mrb[0].mxu0
    %v621 = vpop.f32.mrb[0].mxu0
    %v622 = vadd.f32 %v572, %v621
    %v623 = vpop.f32.mrb[0].mxu0
    %624 = vmatprep.mubr.bf16.mxu0 0
    %625 = vmatmul.mubr.bf16.gmra.mrb[0].mxu0 %v578
    %v626 = vpop.f32.mrb[0].mxu0
    %v627 = vadd.f32 %v572, %v626
    %v628 = vpop.f32.mrb[0].mxu0
    %v629 = vpop.f32.mrb[0].mxu0
    %v630 = vpop.f32.mrb[0].mxu0
    %631 = vdwg.mxu0
    %v632 = vmul.f32 %v619, 0.5
    %v633 = vmul.f32 %v622, 0.5
    %v634 = vmul.f32 %v627, 0.5
    %v635 = vmul.f32 %v619, 0.044715
    %v636 = vmul.f32 %v622, 0.044715
    %v637 = vmul.f32 %v627, 0.044715
    %v638 = vmul.f32 %v635, %v619
    %v639 = vmul.f32 %v636, %v622
    %v640 = vmul.f32 %v637, %v627
    %v641 = vmul.f32 %v638, %v619
    %v642 = vmul.f32 %v639, %v622
    %v643 = vmul.f32 %v640, %v627
    %v644 = vadd.f32 %v619, %v641
    %v645 = vadd.f32 %v622, %v642
    %v646 = vadd.f32 %v627, %v643
    %v647 = vmul.f32 %v644, 0.7978846
    %v648 = vmul.f32 %v645, 0.7978846
    %v649 = vmul.f32 %v646, 0.7978846
    %v650 = vtanh.pop %v647
    %v651 = vtanh.pop %v648
    %v652 = vtanh.pop %v649
    %v653 = vadd.f32 %v650, 1.0
    %v654 = vadd.f32 %v651, 1.0
    %v655 = vadd.f32 %v652, 1.0
    %v656 = vmul.f32 %v632, %v653
    %v657 = vmul.f32 %v633, %v654
    %v658 = vmul.f32 %v634, %v655
    %v659 = vmul.f32 %v656, %v656
    %v660 = vmul.f32 %v657, %v657
    %v661 = vmul.f32 %v658, %v658
    %vm662 = vcmask 195584
    %v663 = vsel %vm662, 1.0, 0
    %665 = vmatprep.subr.mxu0 %v659
    %666 = vmatpush1.msra.mxu0 %v656
    %667 = vmatprep.subr.mxu0 %v660
    %668 = vmatpush1.msra.mxu0 %v657
    %669 = vmatprep.subr.mxu0 %v661
    %670 = vmatpush1.msra.mxu0 %v658
    %671 = vmatprep.subr.mxu0 0.0
    %672 = vmatpush1.msra.mxu0 0.0
    %673 = vmatprep.subr.mxu0 0.0
    %674 = vmatpush1.msra.mxu0 0.0
    %675 = vmatprep.subr.mxu0 0.0
    %676 = vmatpush1.msra.mxu0 0.0
    %677 = vmatprep.subr.mxu0 0.0
    %678 = vmatpush1.msra.mxu0 0.0
    %679 = vmatprep.subr.mxu0 0.0
    %680 = vmatpush1.msra.mxu0 0.0
    %681 = vmatprep.subr.mxu0 0.0
    %682 = vmatpush1.msra.mxu0 0.0
    %683 = vmatprep.subr.mxu0 0.0
    %684 = vmatpush1.msra.mxu0 0.0
    %685 = vmatprep.subr.mxu0 0.0
    %686 = vmatpush1.msra.mxu0 0.0
    %687 = vmatprep.subr.mxu0 0.0
    %688 = vmatpush1.msra.mxu0 0.0
    %689 = vmatprep.subr.mxu0 0.0
    %690 = vmatpush1.msra.mxu0 0.0
    %691 = vmatprep.subr.mxu0 0.0
    %692 = vmatpush1.msra.mxu0 0.0
    %693 = vmatprep.subr.mxu0 0.0
    %694 = vmatpush1.msra.mxu0 0.0
    %695 = vmatprep.subr.mxu0 0.0
    %696 = vmatpush1.msra.mxu0 0.0
    %697 = vmatprep.subr.mxu0 0.0
    %698 = vmatpush1.msra.mxu0 0.0
    %699 = vmatprep.subr.mxu0 0.0
    %700 = vmatpush1.msra.mxu0 0.0
    %701 = vmatprep.subr.mxu0 0.0
    %702 = vmatpush1.msra.mxu0 0.0
    %703 = vmatprep.subr.mxu0 0.0
    %704 = vmatpush1.msra.mxu0 0.0
    %705 = vmatprep.subr.mxu0 0.0
    %706 = vmatpush1.msra.mxu0 0.0
    %707 = vmatprep.subr.mxu0 0.0
    %708 = vmatpush1.msra.mxu0 0.0
    %709 = vmatprep.subr.mxu0 0.0
    %710 = vmatpush1.msra.mxu0 0.0
    %711 = vmatprep.subr.mxu0 0.0
    %712 = vmatpush1.msra.mxu0 0.0
    %713 = vmatprep.subr.mxu0 0.0
    %714 = vmatpush1.msra.mxu0 0.0
    %715 = vmatprep.subr.mxu0 0.0
    %716 = vmatpush1.msra.mxu0 0.0
    %717 = vmatprep.subr.mxu0 0.0
    %718 = vmatpush1.msra.mxu0 0.0
    %719 = vmatprep.subr.mxu0 0.0
    %720 = vmatpush1.msra.mxu0 0.0
    %721 = vmatprep.subr.mxu0 0.0
    %722 = vmatpush1.msra.mxu0 0.0
    %723 = vmatprep.subr.mxu0 0.0
    %724 = vmatpush1.msra.mxu0 0.0
    %725 = vmatprep.subr.mxu0 0.0
    %726 = vmatpush1.msra.mxu0 0.0
    %727 = vmatprep.subr.mxu0 0.0
    %728 = vmatpush1.msra.mxu0 0.0
    %729 = vmatprep.mubr.f32.mxu0 0.0
    %730 = vmatmul.mubr.f32.gmra.mrb[0].mxu0 %v663
    %v731 = vpop.f32.mrb[0].mxu0
    %v732 = vadd.f32 0.0, %v731
    %v733 = vpop.f32.mrb[0].mxu0
    %v734 = vadd.f32 0.0, %v733
    %735 = vdwg.mxu0
    %v736 = vmul.f32 %v732, 0.041666668
    %v737 = vmul.f32 %v734, 0.041666668
    %v738 = vmul.f32 %v736, %v736
    %v739 = vsub.f32 %v737, %v738
    %v740 = vmax.f32 %v739, 0.0
    %v741 = vadd.f32 %v740, 1e-05
    %v742 = vrsqrt.pop %v741
    %v744 = vrot.slane %v742, 7
    %v746 = vmul.f32 %v561, %v744
    %v748 = vrot.slane %v746, 1
    %v750 = vmul.f32 %v736, %v748
    %v752 = vrot.slane %v750, 6
    %v754 = vsub.f32 %v561, %v752
    %v755 = vlaneseq
    %v756 = vshrl.u32 %v755, 7
    %v757 = vsub.s32 1, %v756
    %v758 = vrot.slane %v746, %v757
    %v759 = vmul.f32 %v656, %v758
    %v760 = vmul.f32 %v657, %v758
    %v761 = vmul.f32 %v658, %v758
    %v762 = vlaneseq
    %v763 = vshrl.u32 %v762, 7
    %v764 = vsub.s32 2, %v763
    %v765 = vrot.slane %v754, %v764
    %v766 = vadd.f32 %v759, %v765
    %v767 = vadd.f32 %v760, %v765
    %v768 = vadd.f32 %v761, %v765
    %v769 = vpack.c.bf16 %v767, %v766
    %v770 = vpack.c.bf16 %v768, %v768
    %v771 = vpack.c.bf16 %v550, %v549
    %v772 = vpack.c.bf16 %v552, %v551
    %v773 = vlaneseq
    %v774 = vshrl.u32 %v773, 7
    %v775 = vsub.s32 3, %v774
    %v776 = vrot.slane %v561, %v775
    %v778 = vsel %vm237, %v769, 0
    %v781 = vsel %vm237, %v770, 0
    %783 = vmatprep.subr.bf16.mxu0 0
    %784 = vmatpush1.bf16.msra.mxu0 %v771
    %785 = vmatprep.subr.bf16.mxu0 0
    %786 = vmatpush1.bf16.msra.mxu0 %v772
    %787 = vmatprep.subr.bf16.mxu0 0
    %788 = vmatpush1.bf16.msra.mxu0 0
    %789 = vmatprep.subr.bf16.mxu0 0
    %790 = vmatpush1.bf16.msra.mxu0 0
    %791 = vmatprep.subr.bf16.mxu0 0
    %792 = vmatpush1.bf16.msra.mxu0 0
    %793 = vmatprep.subr.bf16.mxu0 0
    %794 = vmatpush1.bf16.msra.mxu0 0
    %795 = vmatprep.subr.bf16.mxu0 0
    %796 = vmatpush1.bf16.msra.mxu0 0
    %797 = vmatprep.subr.bf16.mxu0 0
    %798 = vmatpush1.bf16.msra.mxu0 0
    %799 = vmatprep.subr.bf16.mxu0 0
    %800 = vmatpush1.bf16.msra.mxu0 0
    %801 = vmatprep.subr.bf16.mxu0 0
    %802 = vmatpush1.bf16.msra.mxu0 0
    %803 = vmatprep.subr.bf16.mxu0 0
    %804 = vmatpush1.bf16.msra.mxu0 0
    %805 = vmatprep.subr.bf16.mxu0 0
    %806 = vmatpush1.bf16.msra.mxu0 0
    %807 = vmatprep.subr.bf16.mxu0 0
    %808 = vmatpush1.bf16.msra.mxu0 0
    %809 = vmatprep.subr.bf16.mxu0 0
    %810 = vmatpush1.bf16.msra.mxu0 0
    %811 = vmatprep.subr.bf16.mxu0 0
    %812 = vmatpush1.bf16.msra.mxu0 0
    %813 = vmatprep.subr.bf16.mxu0 0
    %814 = vmatpush1.bf16.msra.mxu0 0
    %815 = vmatprep.mubr.bf16.mxu0 0
    %816 = vmatmul.mubr.bf16.gmra.mrb[0].mxu0 %v778
    %v817 = vpop.f32.mrb[0].mxu0
    %v818 = vadd.f32 %v776, %v817
    %v819 = vpop.f32.mrb[0].mxu0
    %v820 = vpop.f32.mrb[0].mxu0
    %v821 = vadd.f32 %v776, %v820
    %v822 = vpop.f32.mrb[0].mxu0
    %823 = vmatprep.mubr.bf16.mxu0 0
    %824 = vmatmul.mubr.bf16.gmra.mrb[0].mxu0 %v781
    %v825 = vpop.f32.mrb[0].mxu0
    %v826 = vadd.f32 %v776, %v825
    %v827 = vpop.f32.mrb[0].mxu0
    %v828 = vpop.f32.mrb[0].mxu0
    %v829 = vpop.f32.mrb[0].mxu0
    %830 = vdwg.mxu0
    %831 = vadd.xlane.f32.xlu0 %v818
    %v832 = vpop.xlane.xlu0 %831
    %833 = vadd.xlane.f32.xlu0 %v821
    %v834 = vpop.xlane.xlu0 %833
    %835 = vadd.xlane.f32.xlu0 %v826
    %v836 = vpop.xlane.xlu0 %835
    %v837 = vmul.f32 %v832, 0.03125
    %v838 = vmul.f32 %v834, 0.03125
    %v839 = vmul.f32 %v836, 0.03125
    %v840 = vmul.f32 %v818, %v818
    %v841 = vmul.f32 %v821, %v821
    %v842 = vmul.f32 %v826, %v826
    %843 = vadd.xlane.f32.xlu0 %v840
    %v844 = vpop.xlane.xlu0 %843
    %845 = vadd.xlane.f32.xlu0 %v841
    %v846 = vpop.xlane.xlu0 %845
    %847 = vadd.xlane.f32.xlu0 %v842
    %v848 = vpop.xlane.xlu0 %847
    %v849 = vmul.f32 %v844, 0.03125
    %v850 = vmul.f32 %v846, 0.03125
    %v851 = vmul.f32 %v848, 0.03125
    %v852 = vmul.f32 %v837, %v837
    %v853 = vmul.f32 %v838, %v838
    %v854 = vmul.f32 %v839, %v839
    %v855 = vsub.f32 %v849, %v852
    %v856 = vsub.f32 %v850, %v853
    %v857 = vsub.f32 %v851, %v854
    %v858 = vmax.f32 %v855, 0.0
    %v859 = vmax.f32 %v856, 0.0
    %v860 = vmax.f32 %v857, 0.0
    %v861 = vsub.f32 %v818, %v837
    %v862 = vsub.f32 %v821, %v838
    %v863 = vsub.f32 %v826, %v839
    %v864 = vadd.f32 %v858, 1e-05
    %v865 = vadd.f32 %v859, 1e-05
    %v866 = vadd.f32 %v860, 1e-05
    %v867 = vrsqrt.pop %v864
    %v868 = vrsqrt.pop %v865
    %v869 = vrsqrt.pop %v866
    %v870 = vmul.f32 %v861, %v867
    %v871 = vmul.f32 %v862, %v868
    %v872 = vmul.f32 %v863, %v869
    %v873 = vlaneseq
    %v874 = vshrl.u32 %v873, 7
    %v875 = vsub.s32 4, %v874
    %v876 = vrot.slane %v561, %v875
    %v877 = vmul.f32 %v870, %v876
    %v878 = vmul.f32 %v871, %v876
    %v879 = vmul.f32 %v872, %v876
    %v880 = vlaneseq
    %v881 = vshrl.u32 %v880, 7
    %v882 = vsub.s32 5, %v881
    %v883 = vrot.slane %v561, %v882
    %v884 = vadd.f32 %v877, %v883
    %v885 = vadd.f32 %v878, %v883
    %v886 = vadd.f32 %v879, %v883
    %v887 = vpack.c.bf16 %v885, %v884
    %v888 = vpack.c.bf16 %v886, %v886
    %v889 = vpack.c.bf16 %v554, %v553
    %v890 = vpack.c.bf16 %v556, %v555
    %v891 = vlaneseq
    %v892 = vshrl.u32 %v891, 7
    %v893 = vsub.s32 0, %v892
    %v894 = vrot.slane %v562, %v893
    %v896 = vsel %vm237, %v887, 0
    %v899 = vsel %vm237, %v888, 0
    %901 = vmatprep.subr.bf16.mxu0 0
    %902 = vmatpush1.bf16.msra.mxu0 %v889
    %903 = vmatprep.subr.bf16.mxu0 0
    %904 = vmatpush1.bf16.msra.mxu0 %v890
    %905 = vmatprep.subr.bf16.mxu0 0
    %906 = vmatpush1.bf16.msra.mxu0 0
    %907 = vmatprep.subr.bf16.mxu0 0
    %908 = vmatpush1.bf16.msra.mxu0 0
    %909 = vmatprep.subr.bf16.mxu0 0
    %910 = vmatpush1.bf16.msra.mxu0 0
    %911 = vmatprep.subr.bf16.mxu0 0
    %912 = vmatpush1.bf16.msra.mxu0 0
    %913 = vmatprep.subr.bf16.mxu0 0
    %914 = vmatpush1.bf16.msra.mxu0 0
    %915 = vmatprep.subr.bf16.mxu0 0
    %916 = vmatpush1.bf16.msra.mxu0 0
    %917 = vmatprep.subr.bf16.mxu0 0
    %918 = vmatpush1.bf16.msra.mxu0 0
    %919 = vmatprep.subr.bf16.mxu0 0
    %920 = vmatpush1.bf16.msra.mxu0 0
    %921 = vmatprep.subr.bf16.mxu0 0
    %922 = vmatpush1.bf16.msra.mxu0 0
    %923 = vmatprep.subr.bf16.mxu0 0
    %924 = vmatpush1.bf16.msra.mxu0 0
    %925 = vmatprep.subr.bf16.mxu0 0
    %926 = vmatpush1.bf16.msra.mxu0 0
    %927 = vmatprep.subr.bf16.mxu0 0
    %928 = vmatpush1.bf16.msra.mxu0 0
    %929 = vmatprep.subr.bf16.mxu0 0
    %930 = vmatpush1.bf16.msra.mxu0 0
    %931 = vmatprep.subr.bf16.mxu0 0
    %932 = vmatpush1.bf16.msra.mxu0 0
    %933 = vmatprep.mubr.bf16.mxu0 0
    %934 = vmatmul.mubr.bf16.gmra.mrb[0].mxu0 %v896
    %v935 = vpop.f32.mrb[0].mxu0
    %v936 = vadd.f32 %v894, %v935
    %v937 = vpop.f32.mrb[0].mxu0
    %v938 = vpop.f32.mrb[0].mxu0
    %v939 = vadd.f32 %v894, %v938
    %v940 = vpop.f32.mrb[0].mxu0
    %941 = vmatprep.mubr.bf16.mxu0 0
    %942 = vmatmul.mubr.bf16.gmra.mrb[0].mxu0 %v899
    %v943 = vpop.f32.mrb[0].mxu0
    %v944 = vadd.f32 %v894, %v943
    %v945 = vpop.f32.mrb[0].mxu0
    %v946 = vpop.f32.mrb[0].mxu0
    %v947 = vpop.f32.mrb[0].mxu0
    %948 = vdwg.mxu0
    %v949 = vmul.f32 %v936, 0.5
    %v950 = vmul.f32 %v939, 0.5
    %v951 = vmul.f32 %v944, 0.5
    %v952 = vmul.f32 %v936, 0.044715
    %v953 = vmul.f32 %v939, 0.044715
    %v954 = vmul.f32 %v944, 0.044715
    %v955 = vmul.f32 %v952, %v936
    %v956 = vmul.f32 %v953, %v939
    %v957 = vmul.f32 %v954, %v944
    %v958 = vmul.f32 %v955, %v936
    %v959 = vmul.f32 %v956, %v939
    %v960 = vmul.f32 %v957, %v944
    %v961 = vadd.f32 %v936, %v958
    %v962 = vadd.f32 %v939, %v959
    %v963 = vadd.f32 %v944, %v960
    %v964 = vmul.f32 %v961, 0.7978846
    %v965 = vmul.f32 %v962, 0.7978846
    %v966 = vmul.f32 %v963, 0.7978846
    %v967 = vtanh.pop %v964
    %v968 = vtanh.pop %v965
    %v969 = vtanh.pop %v966
    %v970 = vadd.f32 %v967, 1.0
    %v971 = vadd.f32 %v968, 1.0
    %v972 = vadd.f32 %v969, 1.0
    %v973 = vmul.f32 %v949, %v970
    %v974 = vmul.f32 %v950, %v971
    %v975 = vmul.f32 %v951, %v972
    %v976 = vmul.f32 %v973, %v973
    %v977 = vmul.f32 %v974, %v974
    %v978 = vmul.f32 %v975, %v975
    %979 = vmatprep.subr.mxu0 %v976
    %980 = vmatpush1.msra.mxu0 %v973
    %981 = vmatprep.subr.mxu0 %v977
    %982 = vmatpush1.msra.mxu0 %v974
    %983 = vmatprep.subr.mxu0 %v978
    %984 = vmatpush1.msra.mxu0 %v975
    %985 = vmatprep.subr.mxu0 0.0
    %986 = vmatpush1.msra.mxu0 0.0
    %987 = vmatprep.subr.mxu0 0.0
    %988 = vmatpush1.msra.mxu0 0.0
    %989 = vmatprep.subr.mxu0 0.0
    %990 = vmatpush1.msra.mxu0 0.0
    %991 = vmatprep.subr.mxu0 0.0
    %992 = vmatpush1.msra.mxu0 0.0
    %993 = vmatprep.subr.mxu0 0.0
    %994 = vmatpush1.msra.mxu0 0.0
    %995 = vmatprep.subr.mxu0 0.0
    %996 = vmatpush1.msra.mxu0 0.0
    %997 = vmatprep.subr.mxu0 0.0
    %998 = vmatpush1.msra.mxu0 0.0
    %999 = vmatprep.subr.mxu0 0.0
    %1000 = vmatpush1.msra.mxu0 0.0
    %1001 = vmatprep.subr.mxu0 0.0
    %1002 = vmatpush1.msra.mxu0 0.0
    %1003 = vmatprep.subr.mxu0 0.0
    %1004 = vmatpush1.msra.mxu0 0.0
    %1005 = vmatprep.subr.mxu0 0.0
    %1006 = vmatpush1.msra.mxu0 0.0
    %1007 = vmatprep.subr.mxu0 0.0
    %1008 = vmatpush1.msra.mxu0 0.0
    %1009 = vmatprep.subr.mxu0 0.0
    %1010 = vmatpush1.msra.mxu0 0.0
    %1011 = vmatprep.subr.mxu0 0.0
    %1012 = vmatpush1.msra.mxu0 0.0
    %1013 = vmatprep.subr.mxu0 0.0
    %1014 = vmatpush1.msra.mxu0 0.0
    %1015 = vmatprep.subr.mxu0 0.0
    %1016 = vmatpush1.msra.mxu0 0.0
    %1017 = vmatprep.subr.mxu0 0.0
    %1018 = vmatpush1.msra.mxu0 0.0
    %1019 = vmatprep.subr.mxu0 0.0
    %1020 = vmatpush1.msra.mxu0 0.0
    %1021 = vmatprep.subr.mxu0 0.0
    %1022 = vmatpush1.msra.mxu0 0.0
    %1023 = vmatprep.subr.mxu0 0.0
    %1024 = vmatpush1.msra.mxu0 0.0
    %1025 = vmatprep.subr.mxu0 0.0
    %1026 = vmatpush1.msra.mxu0 0.0
    %1027 = vmatprep.subr.mxu0 0.0
    %1028 = vmatpush1.msra.mxu0 0.0
    %1029 = vmatprep.subr.mxu0 0.0
    %1030 = vmatpush1.msra.mxu0 0.0
    %1031 = vmatprep.subr.mxu0 0.0
    %1032 = vmatpush1.msra.mxu0 0.0
    %1033 = vmatprep.subr.mxu0 0.0
    %1034 = vmatpush1.msra.mxu0 0.0
    %1035 = vmatprep.subr.mxu0 0.0
    %1036 = vmatpush1.msra.mxu0 0.0
    %1037 = vmatprep.subr.mxu0 0.0
    %1038 = vmatpush1.msra.mxu0 0.0
    %1039 = vmatprep.subr.mxu0 0.0
    %1040 = vmatpush1.msra.mxu0 0.0
    %1041 = vmatprep.subr.mxu0 0.0
    %1042 = vmatpush1.msra.mxu0 0.0
    %1043 = vmatprep.mubr.f32.mxu0 0.0
    %1044 = vmatmul.mubr.f32.gmra.mrb[0].mxu0 %v663
    %v1045 = vpop.f32.mrb[0].mxu0
    %v1046 = vadd.f32 0.0, %v1045
    %v1047 = vpop.f32.mrb[0].mxu0
    %v1048 = vadd.f32 0.0, %v1047
    %1049 = vdwg.mxu0
    %v1050 = vmul.f32 %v1046, 0.041666668
    %v1051 = vmul.f32 %v1048, 0.041666668
    %v1052 = vmul.f32 %v1050, %v1050
    %v1053 = vsub.f32 %v1051, %v1052
    %v1054 = vmax.f32 %v1053, 0.0
    %v1055 = vadd.f32 %v1054, 1e-05
    %v1056 = vrsqrt.pop %v1055
    %v1058 = vrot.slane %v1056, 7
    %v1060 = vmul.f32 %v562, %v1058
    %v1062 = vrot.slane %v1060, 1
    %v1064 = vmul.f32 %v1050, %v1062
    %v1066 = vrot.slane %v1064, 6
    %v1068 = vsub.f32 %v562, %v1066
    %v1069 = vlaneseq
    %v1070 = vshrl.u32 %v1069, 7
    %v1071 = vsub.s32 1, %v1070
    %v1072 = vrot.slane %v1060, %v1071
    %v1073 = vmul.f32 %v973, %v1072
    %v1074 = vmul.f32 %v974, %v1072
    %v1075 = vmul.f32 %v975, %v1072
    %v1076 = vlaneseq
    %v1077 = vshrl.u32 %v1076, 7
    %v1078 = vsub.s32 2, %v1077
    %v1079 = vrot.slane %v1068, %v1078
    %v1080 = vadd.f32 %v1073, %v1079
    %v1081 = vadd.f32 %v1074, %v1079
    %v1082 = vadd.f32 %v1075, %v1079
    %v1083 = vpack.c.bf16 %v1081, %v1080
    %v1084 = vpack.c.bf16 %v1082, %v1082
    %v1085 = vpack.c.bf16 %v558, %v557
    %v1086 = vpack.c.bf16 %v560, %v559
    %v1087 = vlaneseq
    %v1088 = vshrl.u32 %v1087, 7
    %v1089 = vsub.s32 3, %v1088
    %v1090 = vrot.slane %v562, %v1089
    %v1092 = vsel %vm237, %v1083, 0
    %v1095 = vsel %vm237, %v1084, 0
    %1097 = vmatprep.subr.bf16.mxu0 0
    %1098 = vmatpush1.bf16.msra.mxu0 %v1085
    %1099 = vmatprep.subr.bf16.mxu0 0
    %1100 = vmatpush1.bf16.msra.mxu0 %v1086
    %1101 = vmatprep.subr.bf16.mxu0 0
    %1102 = vmatpush1.bf16.msra.mxu0 0
    %1103 = vmatprep.subr.bf16.mxu0 0
    %1104 = vmatpush1.bf16.msra.mxu0 0
    %1105 = vmatprep.subr.bf16.mxu0 0
    %1106 = vmatpush1.bf16.msra.mxu0 0
    %1107 = vmatprep.subr.bf16.mxu0 0
    %1108 = vmatpush1.bf16.msra.mxu0 0
    %1109 = vmatprep.subr.bf16.mxu0 0
    %1110 = vmatpush1.bf16.msra.mxu0 0
    %1111 = vmatprep.subr.bf16.mxu0 0
    %1112 = vmatpush1.bf16.msra.mxu0 0
    %1113 = vmatprep.subr.bf16.mxu0 0
    %1114 = vmatpush1.bf16.msra.mxu0 0
    %1115 = vmatprep.subr.bf16.mxu0 0
    %1116 = vmatpush1.bf16.msra.mxu0 0
    %1117 = vmatprep.subr.bf16.mxu0 0
    %1118 = vmatpush1.bf16.msra.mxu0 0
    %1119 = vmatprep.subr.bf16.mxu0 0
    %1120 = vmatpush1.bf16.msra.mxu0 0
    %1121 = vmatprep.subr.bf16.mxu0 0
    %1122 = vmatpush1.bf16.msra.mxu0 0
    %1123 = vmatprep.subr.bf16.mxu0 0
    %1124 = vmatpush1.bf16.msra.mxu0 0
    %1125 = vmatprep.subr.bf16.mxu0 0
    %1126 = vmatpush1.bf16.msra.mxu0 0
    %1127 = vmatprep.subr.bf16.mxu0 0
    %1128 = vmatpush1.bf16.msra.mxu0 0
    %1129 = vmatprep.mubr.bf16.mxu0 0
    %1130 = vmatmul.mubr.bf16.gmra.mrb[0].mxu0 %v1092
    %v1131 = vpop.f32.mrb[0].mxu0
    %v1132 = vadd.f32 %v1090, %v1131
    %v1133 = vpop.f32.mrb[0].mxu0
    %v1134 = vpop.f32.mrb[0].mxu0
    %v1135 = vadd.f32 %v1090, %v1134
    %v1136 = vpop.f32.mrb[0].mxu0
    %1137 = vmatprep.mubr.bf16.mxu0 0
    %1138 = vmatmul.mubr.bf16.gmra.mrb[0].mxu0 %v1095
    %v1139 = vpop.f32.mrb[0].mxu0
    %v1140 = vadd.f32 %v1090, %v1139
    %v1141 = vpop.f32.mrb[0].mxu0
    %v1142 = vpop.f32.mrb[0].mxu0
    %v1143 = vpop.f32.mrb[0].mxu0
    %1144 = vdwg.mxu0
    %1145 = vst [vmem:[%s4 + $0x10] sm:$0xff] %v1132
    %1146 = vst [vmem:[%s4 + $0x18] sm:$0xff] %v1135
    %1147 = vst [vmem:[%s4 + $0x20] sm:$0xff] %v1140
    %v1148 = vld [vmem:[#allocation2 + $0xf0] sm:$0x7]
    %v1149 = vld [vmem:[#allocation2 + $0xf8] sm:$0xff]
    %v1150 = vld [vmem:[#allocation2 + $0x100] sm:$0xff]
    %v1151 = vld [vmem:[#allocation2 + $0x108] sm:$0xff]
    %v1152 = vld [vmem:[#allocation2 + $0x110] sm:$0xff]
    %v1153 = vld [vmem:[#allocation2 + $0x118] sm:$0xff]
    %v1154 = vld [vmem:[#allocation2 + $0x120] sm:$0xff]
    %v1155 = vld [vmem:[#allocation2 + $0x128] sm:$0xff]
    %v1156 = vld [vmem:[#allocation2 + $0x130] sm:$0xff]
    %v1157 = vld [vmem:[#allocation2 + $0x138] sm:$0xff]
    %v1158 = vld [vmem:[#allocation2 + $0x140] sm:$0xff]
    %v1159 = vld [vmem:[#allocation2 + $0x148] sm:$0xff]
    %v1160 = vld [vmem:[#allocation2 + $0x150] sm:$0xff]
    %v1161 = vld [vmem:[#allocation2 + $0x158] sm:$0xff]
    %v1162 = vld [vmem:[#allocation2 + $0x160] sm:$0xff]
    %v1163 = vld [vmem:[%s2] sm:$0xf]
    %v1164 = vpack.c.bf16 %v1163, %v1163
    %v1165 = vpack.c.bf16 %v1148, %v1148
    %v1166 = vlaneseq
    %v1167 = vshrl.u32 %v1166, 7
    %v1168 = vsub.s32 0, %v1167
    %v1169 = vrot.slane %v1161, %v1168
    %vm1170 = vcmask 23552
    %v1172 = vsel %vm1170, %v1164, 0
    %vm1174 = vcmask 1040384
    %v1175 = vsel %vm1174, 4294967295, 65535
    %v1176 = vsel %vm580, %v1175, 0
    %v1178 = vand.u32 %v1165, %v1176
    %1180 = vmatprep.subr.bf16.mxu0 0
    %1181 = vmatpush1.bf16.msra.mxu0 %v1178
    %1182 = vmatprep.subr.bf16.mxu0 0
    %1183 = vmatpush1.bf16.msra.mxu0 0
    %1184 = vmatprep.subr.bf16.mxu0 0
    %1185 = vmatpush1.bf16.msra.mxu0 0
    %1186 = vmatprep.subr.bf16.mxu0 0
    %1187 = vmatpush1.bf16.msra.mxu0 0
    %1188 = vmatprep.subr.bf16.mxu0 0
    %1189 = vmatpush1.bf16.msra.mxu0 0
    %1190 = vmatprep.subr.bf16.mxu0 0
    %1191 = vmatpush1.bf16.msra.mxu0 0
    %1192 = vmatprep.subr.bf16.mxu0 0
    %1193 = vmatpush1.bf16.msra.mxu0 0
    %1194 = vmatprep.subr.bf16.mxu0 0
    %1195 = vmatpush1.bf16.msra.mxu0 0
    %1196 = vmatprep.subr.bf16.mxu0 0
    %1197 = vmatpush1.bf16.msra.mxu0 0
    %1198 = vmatprep.subr.bf16.mxu0 0
    %1199 = vmatpush1.bf16.msra.mxu0 0
    %1200 = vmatprep.subr.bf16.mxu0 0
    %1201 = vmatpush1.bf16.msra.mxu0 0
    %1202 = vmatprep.subr.bf16.mxu0 0
    %1203 = vmatpush1.bf16.msra.mxu0 0
    %1204 = vmatprep.subr.bf16.mxu0 0
    %1205 = vmatpush1.bf16.msra.mxu0 0
    %1206 = vmatprep.subr.bf16.mxu0 0
    %1207 = vmatpush1.bf16.msra.mxu0 0
    %1208 = vmatprep.subr.bf16.mxu0 0
    %1209 = vmatpush1.bf16.msra.mxu0 0
    %1210 = vmatprep.subr.bf16.mxu0 0
    %1211 = vmatpush1.bf16.msra.mxu0 0
    %1212 = vmatprep.mubr.bf16.mxu0 0
    %1213 = vmatmul.mubr.bf16.gmra.mrb[0].mxu0 %v1172
    %v1214 = vpop.f32.mrb[0].mxu0
    %v1215 = vadd.f32 %v1169, %v1214
    %v1216 = vpop.f32.mrb[0].mxu0
    %v1217 = vpop.f32.mrb[0].mxu0
    %v1218 = vpop.f32.mrb[0].mxu0
    %1219 = vdwg.mxu0
    %v1220 = vmul.f32 %v1215, 0.5
    %v1221 = vmul.f32 %v1215, 0.044715
    %v1222 = vmul.f32 %v1221, %v1215
    %v1223 = vmul.f32 %v1222, %v1215
    %v1224 = vadd.f32 %v1215, %v1223
    %v1225 = vmul.f32 %v1224, 0.7978846
    %v1226 = vtanh.pop %v1225
    %v1227 = vadd.f32 %v1226, 1.0
    %v1228 = vmul.f32 %v1220, %v1227
    %v1229 = vmul.f32 %v1228, %v1228
    %v1230 = vsel %vm573, 1.0, 0
    %vm1232 = vcmask 1043456
    %v1234 = vsel %vm1232, %v1228, 0
    %v1237 = vsel %vm1232, %v1229, 0
    %1239 = vmatprep.subr.mxu0 %v1237
    %1240 = vmatpush1.msra.mxu0 %v1234
    %1241 = vmatprep.subr.mxu0 0.0
    %1242 = vmatpush1.msra.mxu0 0.0
    %1243 = vmatprep.subr.mxu0 0.0
    %1244 = vmatpush1.msra.mxu0 0.0
    %1245 = vmatprep.subr.mxu0 0.0
    %1246 = vmatpush1.msra.mxu0 0.0
    %1247 = vmatprep.subr.mxu0 0.0
    %1248 = vmatpush1.msra.mxu0 0.0
    %1249 = vmatprep.subr.mxu0 0.0
    %1250 = vmatpush1.msra.mxu0 0.0
    %1251 = vmatprep.subr.mxu0 0.0
    %1252 = vmatpush1.msra.mxu0 0.0
    %1253 = vmatprep.subr.mxu0 0.0
    %1254 = vmatpush1.msra.mxu0 0.0
    %1255 = vmatprep.subr.mxu0 0.0
    %1256 = vmatpush1.msra.mxu0 0.0
    %1257 = vmatprep.subr.mxu0 0.0
    %1258 = vmatpush1.msra.mxu0 0.0
    %1259 = vmatprep.subr.mxu0 0.0
    %1260 = vmatpush1.msra.mxu0 0.0
    %1261 = vmatprep.subr.mxu0 0.0
    %1262 = vmatpush1.msra.mxu0 0.0
    %1263 = vmatprep.subr.mxu0 0.0
    %1264 = vmatpush1.msra.mxu0 0.0
    %1265 = vmatprep.subr.mxu0 0.0
    %1266 = vmatpush1.msra.mxu0 0.0
    %1267 = vmatprep.subr.mxu0 0.0
    %1268 = vmatpush1.msra.mxu0 0.0
    %1269 = vmatprep.subr.mxu0 0.0
    %1270 = vmatpush1.msra.mxu0 0.0
    %1271 = vmatprep.subr.mxu0 0.0
    %1272 = vmatpush1.msra.mxu0 0.0
    %1273 = vmatprep.subr.mxu0 0.0
    %1274 = vmatpush1.msra.mxu0 0.0
    %1275 = vmatprep.subr.mxu0 0.0
    %1276 = vmatpush1.msra.mxu0 0.0
    %1277 = vmatprep.subr.mxu0 0.0
    %1278 = vmatpush1.msra.mxu0 0.0
    %1279 = vmatprep.subr.mxu0 0.0
    %1280 = vmatpush1.msra.mxu0 0.0
    %1281 = vmatprep.subr.mxu0 0.0
    %1282 = vmatpush1.msra.mxu0 0.0
    %1283 = vmatprep.subr.mxu0 0.0
    %1284 = vmatpush1.msra.mxu0 0.0
    %1285 = vmatprep.subr.mxu0 0.0
    %1286 = vmatpush1.msra.mxu0 0.0
    %1287 = vmatprep.subr.mxu0 0.0
    %1288 = vmatpush1.msra.mxu0 0.0
    %1289 = vmatprep.subr.mxu0 0.0
    %1290 = vmatpush1.msra.mxu0 0.0
    %1291 = vmatprep.subr.mxu0 0.0
    %1292 = vmatpush1.msra.mxu0 0.0
    %1293 = vmatprep.subr.mxu0 0.0
    %1294 = vmatpush1.msra.mxu0 0.0
    %1295 = vmatprep.subr.mxu0 0.0
    %1296 = vmatpush1.msra.mxu0 0.0
    %1297 = vmatprep.subr.mxu0 0.0
    %1298 = vmatpush1.msra.mxu0 0.0
    %1299 = vmatprep.subr.mxu0 0.0
    %1300 = vmatpush1.msra.mxu0 0.0
    %1301 = vmatprep.subr.mxu0 0.0
    %1302 = vmatpush1.msra.mxu0 0.0
    %1303 = vmatprep.mubr.f32.mxu0 0.0
    %1304 = vmatmul.mubr.f32.gmra.mrb[0].mxu0 %v1230
    %v1305 = vpop.f32.mrb[0].mxu0
    %v1306 = vadd.f32 0.0, %v1305
    %v1307 = vpop.f32.mrb[0].mxu0
    %v1308 = vadd.f32 0.0, %v1307
    %1309 = vdwg.mxu0
    %v1310 = vmul.f32 %v1306, 0.25
    %v1311 = vmul.f32 %v1308, 0.25
    %v1312 = vmul.f32 %v1310, %v1310
    %v1313 = vsub.f32 %v1311, %v1312
    %v1314 = vmax.f32 %v1313, 0.0
    %v1315 = vadd.f32 %v1314, 1e-05
    %v1316 = vrsqrt.pop %v1315
    %v1318 = vrot.slane %v1316, 7
    %v1320 = vmul.f32 %v1161, %v1318
    %v1322 = vrot.slane %v1320, 1
    %v1324 = vmul.f32 %v1310, %v1322
    %v1326 = vrot.slane %v1324, 6
    %v1328 = vsub.f32 %v1161, %v1326
    %v1329 = vlaneseq
    %v1330 = vshrl.u32 %v1329, 7
    %v1331 = vsub.s32 1, %v1330
    %v1332 = vrot.slane %v1320, %v1331
    %v1333 = vmul.f32 %v1228, %v1332
    %v1334 = vlaneseq
    %v1335 = vshrl.u32 %v1334, 7
    %v1336 = vsub.s32 2, %v1335
    %v1337 = vrot.slane %v1328, %v1336
    %v1338 = vadd.f32 %v1333, %v1337
    %v1339 = vpack.c.bf16 %v1338, %v1338
    %v1340 = vpack.c.bf16 %v1150, %v1149
    %v1341 = vpack.c.bf16 %v1152, %v1151
    %v1342 = vlaneseq
    %v1343 = vshrl.u32 %v1342, 7
    %v1344 = vsub.s32 3, %v1343
    %v1345 = vrot.slane %v1161, %v1344
    %v1347 = vsel %vm237, %v1339, 0
    %1349 = vmatprep.subr.bf16.mxu0 0
    %1350 = vmatpush1.bf16.msra.mxu0 %v1340
    %1351 = vmatprep.subr.bf16.mxu0 0
    %1352 = vmatpush1.bf16.msra.mxu0 %v1341
    %1353 = vmatprep.subr.bf16.mxu0 0
    %1354 = vmatpush1.bf16.msra.mxu0 0
    %1355 = vmatprep.subr.bf16.mxu0 0
    %1356 = vmatpush1.bf16.msra.mxu0 0
    %1357 = vmatprep.subr.bf16.mxu0 0
    %1358 = vmatpush1.bf16.msra.mxu0 0
    %1359 = vmatprep.subr.bf16.mxu0 0
    %1360 = vmatpush1.bf16.msra.mxu0 0
    %1361 = vmatprep.subr.bf16.mxu0 0
    %1362 = vmatpush1.bf16.msra.mxu0 0
    %1363 = vmatprep.subr.bf16.mxu0 0
    %1364 = vmatpush1.bf16.msra.mxu0 0
    %1365 = vmatprep.subr.bf16.mxu0 0
    %1366 = vmatpush1.bf16.msra.mxu0 0
    %1367 = vmatprep.subr.bf16.mxu0 0
    %1368 = vmatpush1.bf16.msra.mxu0 0
    %1369 = vmatprep.subr.bf16.mxu0 0
    %1370 = vmatpush1.bf16.msra.mxu0 0
    %1371 = vmatprep.subr.bf16.mxu0 0
    %1372 = vmatpush1.bf16.msra.mxu0 0
    %1373 = vmatprep.subr.bf16.mxu0 0
    %1374 = vmatpush1.bf16.msra.mxu0 0
    %1375 = vmatprep.subr.bf16.mxu0 0
    %1376 = vmatpush1.bf16.msra.mxu0 0
    %1377 = vmatprep.subr.bf16.mxu0 0
    %1378 = vmatpush1.bf16.msra.mxu0 0
    %1379 = vmatprep.subr.bf16.mxu0 0
    %1380 = vmatpush1.bf16.msra.mxu0 0
    %1381 = vmatprep.mubr.bf16.mxu0 0
    %1382 = vmatmul.mubr.bf16.gmra.mrb[0].mxu0 %v1347
    %v1383 = vpop.f32.mrb[0].mxu0
    %v1384 = vadd.f32 %v1345, %v1383
    %v1385 = vpop.f32.mrb[0].mxu0
    %v1386 = vpop.f32.mrb[0].mxu0
    %v1387 = vpop.f32.mrb[0].mxu0
    %1388 = vdwg.mxu0
    %v1389 = vsel %vm1232, %v1384, 0.0
    %1390 = vadd.xlane.f32.xlu0 %v1389
    %v1391 = vpop.xlane.xlu0 %1390
    %v1392 = vmul.f32 %v1391, 0.03125
    %v1393 = vmul.f32 %v1384, %v1384
    %v1394 = vsel %vm1232, %v1393, 0.0
    %1395 = vadd.xlane.f32.xlu0 %v1394
    %v1396 = vpop.xlane.xlu0 %1395
    %v1397 = vmul.f32 %v1396, 0.03125
    %v1398 = vmul.f32 %v1392, %v1392
    %v1399 = vsub.f32 %v1397, %v1398
    %v1400 = vmax.f32 %v1399, 0.0
    %v1401 = vsub.f32 %v1384, %v1392
    %v1402 = vadd.f32 %v1400, 1e-05
    %v1403 = vrsqrt.pop %v1402
    %v1404 = vmul.f32 %v1401, %v1403
    %v1405 = vlaneseq
    %v1406 = vshrl.u32 %v1405, 7
    %v1407 = vsub.s32 4, %v1406
    %v1408 = vrot.slane %v1161, %v1407
    %v1409 = vmul.f32 %v1404, %v1408
    %v1410 = vlaneseq
    %v1411 = vshrl.u32 %v1410, 7
    %v1412 = vsub.s32 5, %v1411
    %v1413 = vrot.slane %v1161, %v1412
    %v1414 = vadd.f32 %v1409, %v1413
    %v1415 = vpack.c.bf16 %v1414, %v1414
    %v1416 = vpack.c.bf16 %v1154, %v1153
    %v1417 = vpack.c.bf16 %v1156, %v1155
    %v1418 = vlaneseq
    %v1419 = vshrl.u32 %v1418, 7
    %v1420 = vsub.s32 0, %v1419
    %v1421 = vrot.slane %v1162, %v1420
    %v1423 = vsel %vm237, %v1415, 0
    %1425 = vmatprep.subr.bf16.mxu0 0
    %1426 = vmatpush1.bf16.msra.mxu0 %v1416
    %1427 = vmatprep.subr.bf16.mxu0 0
    %1428 = vmatpush1.bf16.msra.mxu0 %v1417
    %1429 = vmatprep.subr.bf16.mxu0 0
    %1430 = vmatpush1.bf16.msra.mxu0 0
    %1431 = vmatprep.subr.bf16.mxu0 0
    %1432 = vmatpush1.bf16.msra.mxu0 0
    %1433 = vmatprep.subr.bf16.mxu0 0
    %1434 = vmatpush1.bf16.msra.mxu0 0
    %1435 = vmatprep.subr.bf16.mxu0 0
    %1436 = vmatpush1.bf16.msra.mxu0 0
    %1437 = vmatprep.subr.bf16.mxu0 0
    %1438 = vmatpush1.bf16.msra.mxu0 0
    %1439 = vmatprep.subr.bf16.mxu0 0
    %1440 = vmatpush1.bf16.msra.mxu0 0
    %1441 = vmatprep.subr.bf16.mxu0 0
    %1442 = vmatpush1.bf16.msra.mxu0 0
    %1443 = vmatprep.subr.bf16.mxu0 0
    %1444 = vmatpush1.bf16.msra.mxu0 0
    %1445 = vmatprep.subr.bf16.mxu0 0
    %1446 = vmatpush1.bf16.msra.mxu0 0
    %1447 = vmatprep.subr.bf16.mxu0 0
    %1448 = vmatpush1.bf16.msra.mxu0 0
    %1449 = vmatprep.subr.bf16.mxu0 0
    %1450 = vmatpush1.bf16.msra.mxu0 0
    %1451 = vmatprep.subr.bf16.mxu0 0
    %1452 = vmatpush1.bf16.msra.mxu0 0
    %1453 = vmatprep.subr.bf16.mxu0 0
    %1454 = vmatpush1.bf16.msra.mxu0 0
    %1455 = vmatprep.subr.bf16.mxu0 0
    %1456 = vmatpush1.bf16.msra.mxu0 0
    %1457 = vmatprep.mubr.bf16.mxu0 0
    %1458 = vmatmul.mubr.bf16.gmra.mrb[0].mxu0 %v1423
    %v1459 = vpop.f32.mrb[0].mxu0
    %v1460 = vadd.f32 %v1421, %v1459
    %v1461 = vpop.f32.mrb[0].mxu0
    %v1462 = vpop.f32.mrb[0].mxu0
    %v1463 = vpop.f32.mrb[0].mxu0
    %1464 = vdwg.mxu0
    %v1465 = vmul.f32 %v1460, 0.5
    %v1466 = vmul.f32 %v1460, 0.044715
    %v1467 = vmul.f32 %v1466, %v1460
    %v1468 = vmul.f32 %v1467, %v1460
    %v1469 = vadd.f32 %v1460, %v1468
    %v1470 = vmul.f32 %v1469, 0.7978846
    %v1471 = vtanh.pop %v1470
    %v1472 = vadd.f32 %v1471, 1.0
    %v1473 = vmul.f32 %v1465, %v1472
    %v1474 = vmul.f32 %v1473, %v1473
    %v1476 = vsel %vm1232, %v1473, 0
    %v1479 = vsel %vm1232, %v1474, 0
    %1481 = vmatprep.subr.mxu0 %v1479
    %1482 = vmatpush1.msra.mxu0 %v1476
    %1483 = vmatprep.subr.mxu0 0.0
    %1484 = vmatpush1.msra.mxu0 0.0
    %1485 = vmatprep.subr.mxu0 0.0
    %1486 = vmatpush1.msra.mxu0 0.0
    %1487 = vmatprep.subr.mxu0 0.0
    %1488 = vmatpush1.msra.mxu0 0.0
    %1489 = vmatprep.subr.mxu0 0.0
    %1490 = vmatpush1.msra.mxu0 0.0
    %1491 = vmatprep.subr.mxu0 0.0
    %1492 = vmatpush1.msra.mxu0 0.0
    %1493 = vmatprep.subr.mxu0 0.0
    %1494 = vmatpush1.msra.mxu0 0.0
    %1495 = vmatprep.subr.mxu0 0.0
    %1496 = vmatpush1.msra.mxu0 0.0
    %1497 = vmatprep.subr.mxu0 0.0
    %1498 = vmatpush1.msra.mxu0 0.0
    %1499 = vmatprep.subr.mxu0 0.0
    %1500 = vmatpush1.msra.mxu0 0.0
    %1501 = vmatprep.subr.mxu0 0.0
    %1502 = vmatpush1.msra.mxu0 0.0
    %1503 = vmatprep.subr.mxu0 0.0
    %1504 = vmatpush1.msra.mxu0 0.0
    %1505 = vmatprep.subr.mxu0 0.0
    %1506 = vmatpush1.msra.mxu0 0.0
    %1507 = vmatprep.subr.mxu0 0.0
    %1508 = vmatpush1.msra.mxu0 0.0
    %1509 = vmatprep.subr.mxu0 0.0
    %1510 = vmatpush1.msra.mxu0 0.0
    %1511 = vmatprep.subr.mxu0 0.0
    %1512 = vmatpush1.msra.mxu0 0.0
    %1513 = vmatprep.subr.mxu0 0.0
    %1514 = vmatpush1.msra.mxu0 0.0
    %1515 = vmatprep.subr.mxu0 0.0
    %1516 = vmatpush1.msra.mxu0 0.0
    %1517 = vmatprep.subr.mxu0 0.0
    %1518 = vmatpush1.msra.mxu0 0.0
    %1519 = vmatprep.subr.mxu0 0.0
    %1520 = vmatpush1.msra.mxu0 0.0
    %1521 = vmatprep.subr.mxu0 0.0
    %1522 = vmatpush1.msra.mxu0 0.0
    %1523 = vmatprep.subr.mxu0 0.0
    %1524 = vmatpush1.msra.mxu0 0.0
    %1525 = vmatprep.subr.mxu0 0.0
    %1526 = vmatpush1.msra.mxu0 0.0
    %1527 = vmatprep.subr.mxu0 0.0
    %1528 = vmatpush1.msra.mxu0 0.0
    %1529 = vmatprep.subr.mxu0 0.0
    %1530 = vmatpush1.msra.mxu0 0.0
    %1531 = vmatprep.subr.mxu0 0.0
    %1532 = vmatpush1.msra.mxu0 0.0
    %1533 = vmatprep.subr.mxu0 0.0
    %1534 = vmatpush1.msra.mxu0 0.0
    %1535 = vmatprep.subr.mxu0 0.0
    %1536 = vmatpush1.msra.mxu0 0.0
    %1537 = vmatprep.subr.mxu0 0.0
    %1538 = vmatpush1.msra.mxu0 0.0
    %1539 = vmatprep.subr.mxu0 0.0
    %1540 = vmatpush1.msra.mxu0 0.0
    %1541 = vmatprep.subr.mxu0 0.0
    %1542 = vmatpush1.msra.mxu0 0.0
    %1543 = vmatprep.subr.mxu0 0.0
    %1544 = vmatpush1.msra.mxu0 0.0
    %1545 = vmatprep.mubr.f32.mxu0 0.0
    %1546 = vmatmul.mubr.f32.gmra.mrb[0].mxu0 %v1230
    %v1547 = vpop.f32.mrb[0].mxu0
    %v1548 = vadd.f32 0.0, %v1547
    %v1549 = vpop.f32.mrb[0].mxu0
    %v1550 = vadd.f32 0.0, %v1549
    %1551 = vdwg.mxu0
    %v1552 = vmul.f32 %v1548, 0.25
    %v1553 = vmul.f32 %v1550, 0.25
    %v1554 = vmul.f32 %v1552, %v1552
    %v1555 = vsub.f32 %v1553, %v1554
    %v1556 = vmax.f32 %v1555, 0.0
    %v1557 = vadd.f32 %v1556, 1e-05
    %v1558 = vrsqrt.pop %v1557
    %v1560 = vrot.slane %v1558, 7
    %v1562 = vmul.f32 %v1162, %v1560
    %v1564 = vrot.slane %v1562, 1
    %v1566 = vmul.f32 %v1552, %v1564
    %v1568 = vrot.slane %v1566, 6
    %v1570 = vsub.f32 %v1162, %v1568
    %v1571 = vlaneseq
    %v1572 = vshrl.u32 %v1571, 7
    %v1573 = vsub.s32 1, %v1572
    %v1574 = vrot.slane %v1562, %v1573
    %v1575 = vmul.f32 %v1473, %v1574
    %v1576 = vlaneseq
    %v1577 = vshrl.u32 %v1576, 7
    %v1578 = vsub.s32 2, %v1577
    %v1579 = vrot.slane %v1570, %v1578
    %v1580 = vadd.f32 %v1575, %v1579
    %v1581 = vpack.c.bf16 %v1580, %v1580
    %v1582 = vpack.c.bf16 %v1158, %v1157
    %v1583 = vpack.c.bf16 %v1160, %v1159
    %v1584 = vlaneseq
    %v1585 = vshrl.u32 %v1584, 7
    %v1586 = vsub.s32 3, %v1585
    %v1587 = vrot.slane %v1162, %v1586
    %v1589 = vsel %vm237, %v1581, 0
    %1591 = vmatprep.subr.bf16.mxu0 0
    %1592 = vmatpush1.bf16.msra.mxu0 %v1582
    %1593 = vmatprep.subr.bf16.mxu0 0
    %1594 = vmatpush1.bf16.msra.mxu0 %v1583
    %1595 = vmatprep.subr.bf16.mxu0 0
    %1596 = vmatpush1.bf16.msra.mxu0 0
    %1597 = vmatprep.subr.bf16.mxu0 0
    %1598 = vmatpush1.bf16.msra.mxu0 0
    %1599 = vmatprep.subr.bf16.mxu0 0
    %1600 = vmatpush1.bf16.msra.mxu0 0
    %1601 = vmatprep.subr.bf16.mxu0 0
    %1602 = vmatpush1.bf16.msra.mxu0 0
    %1603 = vmatprep.subr.bf16.mxu0 0
    %1604 = vmatpush1.bf16.msra.mxu0 0
    %1605 = vmatprep.subr.bf16.mxu0 0
    %1606 = vmatpush1.bf16.msra.mxu0 0
    %1607 = vmatprep.subr.bf16.mxu0 0
    %1608 = vmatpush1.bf16.msra.mxu0 0
    %1609 = vmatprep.subr.bf16.mxu0 0
    %1610 = vmatpush1.bf16.msra.mxu0 0
    %1611 = vmatprep.subr.bf16.mxu0 0
    %1612 = vmatpush1.bf16.msra.mxu0 0
    %1613 = vmatprep.subr.bf16.mxu0 0
    %1614 = vmatpush1.bf16.msra.mxu0 0
    %1615 = vmatprep.subr.bf16.mxu0 0
    %1616 = vmatpush1.bf16.msra.mxu0 0
    %1617 = vmatprep.subr.bf16.mxu0 0
    %1618 = vmatpush1.bf16.msra.mxu0 0
    %1619 = vmatprep.subr.bf16.mxu0 0
    %1620 = vmatpush1.bf16.msra.mxu0 0
    %1621 = vmatprep.subr.bf16.mxu0 0
    %1622 = vmatpush1.bf16.msra.mxu0 0
    %1623 = vmatprep.mubr.bf16.mxu0 0
    %1624 = vmatmul.mubr.bf16.gmra.mrb[0].mxu0 %v1589
    %v1625 = vpop.f32.mrb[0].mxu0
    %v1626 = vadd.f32 %v1587, %v1625
    %v1627 = vpop.f32.mrb[0].mxu0
    %v1628 = vpop.f32.mrb[0].mxu0
    %v1629 = vpop.f32.mrb[0].mxu0
    %1630 = vdwg.mxu0
    %1631 = vst [vmem:[%s4 + $0x28] sm:$0xf] %v1626
    // Predicated region
    $region22: #{fwd.1} parent=1 // pred_check
      _
    $region23: #{fwd.1} parent=1 // pred_check_branch
      %1633 = sbr.rel (0) target = $region25
    $region24: #{fwd.1} parent=1 // pred_region
      _
    $region25: #{fwd.1} parent=1 // pred_fallthru
      _
    // Predicated region
    $region26: #{fwd.1} parent=1 // pred_check
      _
    $region27: #{fwd.1} parent=1 // pred_check_branch
      %1635 = sbr.rel (0) target = $region29
    $region28: #{fwd.1} parent=1 // pred_region
      _
    $region29: #{fwd.1} parent=1 // pred_fallthru
      _
    %1636 = vsyncpa [#allocation3], 1

</llo_original>
